<compile_context>
chip_gen: v5e
topology: v5e:2x2
jax: 0.10.0
libtpu: 0.0.40
codegen_flags: <defaults>
</compile_context>

<pallas_src>
import functools
import math

import jax
import jax.numpy as jnp
from jax import lax
from jax.experimental import pallas as pl
from jax.experimental.pallas import tpu as pltpu


# ---------------------------------------------------------------------------
# Fused cross-attention + residual + LayerNorm kernel (one batch tile / step)
# ---------------------------------------------------------------------------
def _cross_attn_layer_kernel(x_ref, c_ref,
                             wq_ref, wk_ref, wv_ref, wo_ref,
                             bq_ref, bk_ref, bv_ref, bo_ref,
                             gamma_ref, beta_ref,
                             o_ref, ctx_ref,
                             *, num_heads, scale, batch_block, lq, lk):
    # x_ref: (Bb*Lq, H) bf16 (query source / residual); c_ref: (Bb*Lk, H) bf16.
    hidden = x_ref.shape[1]
    hd = hidden // num_heads

    x = x_ref[...]
    c = c_ref[...]

    # --- QKV projections: bf16 MXU operands, f32 accumulation.  The 1/sqrt(hd)
    #     attention scale is folded into q once here (cheap (rows,H) multiply)
    #     instead of scaling every (Lq,Lk) score tile per head. ---
    q = (jnp.dot(x, wq_ref[...], preferred_element_type=jnp.float32)
         + bq_ref[...]) * scale
    k = jnp.dot(c, wk_ref[...], preferred_element_type=jnp.float32) + bk_ref[...]
    v = jnp.dot(c, wv_ref[...], preferred_element_type=jnp.float32) + bv_ref[...]
    # keep only bf16 copies live across the attention loops
    q = q.astype(jnp.bfloat16)
    k = k.astype(jnp.bfloat16)
    v = v.astype(jnp.bfloat16)

    # --- per-(batch, head) attention; each head's context is written into the
    #     bf16 VMEM ctx scratch so the output projection is ONE big matmul. ---
    for b in range(batch_block):
        qb = q[b * lq:(b + 1) * lq, :]          # (Lq, H)
        kb = k[b * lk:(b + 1) * lk, :]          # (Lk, H)
        vb = v[b * lk:(b + 1) * lk, :]          # (Lk, H)
        for h_i in range(num_heads):
            cs = slice(h_i * hd, (h_i + 1) * hd)
            # scores = (q*scale) @ k^T, f32 accumulation
            s = lax.dot_general(qb[:, cs], kb[:, cs], (((1,), (1,)), ((), ())),
                                preferred_element_type=jnp.float32)
            # deferred-normalisation softmax: e = exp(s - max), normalise the
            # (Lq, hd) context rows with an EUP approx reciprocal instead of a
            # per-(Lq,Lk) VPU divide.
            s = s - jnp.max(s, axis=-1, keepdims=True)
            e = jnp.exp(s)
            inv = pl.reciprocal(jnp.sum(e, axis=-1, keepdims=True), approx=True)
            ctx_h = jnp.dot(e.astype(jnp.bfloat16), vb[:, cs],
                            preferred_element_type=jnp.float32) * inv
            ctx_ref[b * lq:(b + 1) * lq, cs] = ctx_h.astype(jnp.bfloat16)

    # --- single full-width output projection over all rows/heads ---
    attn = jnp.dot(ctx_ref[...], wo_ref[...],
                   preferred_element_type=jnp.float32) + bo_ref[...]

    # --- residual + LayerNorm (eps=1e-5, biased variance; torch semantics) ---
    h = x.astype(jnp.float32) + attn
    mean = jnp.mean(h, axis=-1, keepdims=True)
    cen = h - mean
    var = jnp.mean(cen * cen, axis=-1, keepdims=True)
    y = cen * lax.rsqrt(var + 1e-5)
    o_ref[...] = (y * gamma_ref[...] + beta_ref[...]).astype(o_ref.dtype)


# ---------------------------------------------------------------------------
# Parameter preparation (hoisted out of the per-layer call)
# ---------------------------------------------------------------------------
def prepare_layer_params(wq, bq, wk, bk, wv, bv, wo, bo, ln_gamma, ln_beta):
    """bf16-cast the (H,H) weights and reshape biases/LN params to (1,H) f32
    ONCE at init, so no per-layer-call f32->bf16 weight round-trips hit HBM."""
    H = wq.shape[0]
    row = lambda a: a.reshape(1, H).astype(jnp.float32)
    b16 = lambda a: a.astype(jnp.bfloat16)
    return (b16(wq), b16(wk), b16(wv), b16(wo),
            row(bq), row(bk), row(bv), row(bo), row(ln_gamma), row(ln_beta))


def _pick_batch_block(B, Lq, Lk, target_rows=256):
    """Smallest divisor Bb of B with Bb*Lq >= target_rows (fills the 256-row
    MXU pipeline) whose row blocks stay sublane-aligned; falls back to the
    full batch (a full-extent block is always legal)."""
    for bb in range(1, B + 1):
        if B % bb:
            continue
        aligned = (bb == B) or ((bb * Lq) % 8 == 0 and (bb * Lk) % 8 == 0)
        if aligned and bb * Lq >= target_rows:
            return bb
    return B


# ---------------------------------------------------------------------------
# Wrapper: one CrossAttentionLayer
# ---------------------------------------------------------------------------
def cross_attention_layer(text, cond, params, *, num_heads=8):
    """text: (B, Lq, H); cond: (B, Lk, H) (bf16 preferred); params from
    prepare_layer_params.  Returns (B, Lq, H) bf16."""
    wq, wk, wv, wo, bq, bk, bv, bo, gamma, beta = params
    B, Lq, H = text.shape
    _, Lk, _ = cond.shape
    assert H % num_heads == 0
    hd = H // num_heads
    # NOTE: best MXU / lane utilisation when hd is a multiple of 128 (true for
    # the real module: hidden=1024, 8 heads -> hd=128). Smaller hd is correct
    # but uses masked lane slices in the head loop.
    scale = 1.0 / math.sqrt(hd)

    # bf16 activations, flattened to lane-dense (rows, H) slabs.
    x2 = text.astype(jnp.bfloat16).reshape(B * Lq, H)
    c2 = cond.astype(jnp.bfloat16).reshape(B * Lk, H)

    Bb = _pick_batch_block(B, Lq, Lk)
    rows_q = Bb * Lq
    rows_k = Bb * Lk

    # Activations: gridded over batch tiles, pipelined by BlockSpec.
    xspec = pl.BlockSpec((rows_q, H), lambda t: (t, 0))
    cspec = pl.BlockSpec((rows_k, H), lambda t: (t, 0))
    ospec = pl.BlockSpec((rows_q, H), lambda t: (t, 0))
    # Weights / params: constant index_map -> VMEM-resident across grid steps.
    wspec = pl.BlockSpec((H, H), lambda t: (0, 0))
    vspec = pl.BlockSpec((1, H), lambda t: (0, 0))

    flops = (2 * B * Lq * H * H            # Q projection
             + 4 * B * Lk * H * H          # K, V projections
             + 2 * B * Lq * H * H          # output projection
             + 4 * B * num_heads * Lq * Lk * hd)   # scores + prob@V
    bytes_accessed = (B * Lq * H * 2 + B * Lk * H * 2   # bf16 activations in
                      + 4 * H * H * 2                   # bf16 weights
                      + 6 * H * 4                       # f32 biases / LN
                      + B * Lq * H * 2)                 # bf16 output
    cost = pl.CostEstimate(
        flops=int(flops),
        transcendentals=int(B * num_heads * Lq * (Lk + 1)),
        bytes_accessed=int(bytes_accessed))

    kernel = functools.partial(_cross_attn_layer_kernel,
                               num_heads=num_heads, scale=scale,
                               batch_block=Bb, lq=Lq, lk=Lk)

    out = pl.pallas_call(
        kernel,
        out_shape=jax.ShapeDtypeStruct((B * Lq, H), jnp.bfloat16),
        grid=(B // Bb,),
        in_specs=[xspec, cspec,
                  wspec, wspec, wspec, wspec,
                  vspec, vspec, vspec, vspec, vspec, vspec],
        out_specs=ospec,
        scratch_shapes=[pltpu.VMEM((rows_q, H), jnp.bfloat16)],
        compiler_params=pltpu.CompilerParams(
            dimension_semantics=("parallel",),
            # headroom for double-buffered bf16 weights (~16 MiB at H=1024)
            # plus activation tiles; well under v7x's 64 MiB physical VMEM.
            vmem_limit_bytes=48 * 1024 * 1024,
        ),
        cost_estimate=cost,
    )(x2, c2, wq, wk, wv, wo, bq, bk, bv, bo, gamma, beta)
    return out.reshape(B, Lq, H)


# ---------------------------------------------------------------------------
# Encoder: stack of cross-attention layers (CLIP text encoder output is input)
# ---------------------------------------------------------------------------
def bert_like_multimodal_encoder(text_features, condition_feats, layer_params,
                                 *, num_heads=8):
    # TODO(synk): self.text_encoder (CLIP) is not translated; `text_features`
    # stands in for text_encoder(...).last_hidden_state.
    h = text_features.astype(jnp.bfloat16)
    cond = condition_feats.astype(jnp.bfloat16)   # cast once, reused by layers
    for p in layer_params:
        h = cross_attention_layer(h, cond, p, num_heads=num_heads)
    return h.astype(jnp.float32)   # single f32 cast at the end of the stack


# ---------------------------------------------------------------------------
# Pure-JAX f32 reference (torch semantics) for correctness checking
# ---------------------------------------------------------------------------
def _reference_layer(text, cond, wq, bq, wk, bk, wv, bv, wo, bo,
                     gamma, beta, num_heads):
    B, Lq, H = text.shape
    Lk = cond.shape[1]
    hd = H // num_heads
    q = text @ wq + bq
    k = cond @ wk + bk
    v = cond @ wv + bv
    q = q.reshape(B, Lq, num_heads, hd).transpose(0, 2, 1, 3)
    k = k.reshape(B, Lk, num_heads, hd).transpose(0, 2, 1, 3)
    v = v.reshape(B, Lk, num_heads, hd).transpose(0, 2, 1, 3)
    s = jnp.einsum("bhqd,bhkd->bhqk", q, k) / math.sqrt(hd)
    p = jax.nn.softmax(s, axis=-1)
    ctx = jnp.einsum("bhqk,bhkd->bhqd", p, v).transpose(0, 2, 1, 3).reshape(B, Lq, H)
    attn = ctx @ wo + bo
    x = text + attn
    mean = jnp.mean(x, axis=-1, keepdims=True)
    var = jnp.mean((x - mean) ** 2, axis=-1, keepdims=True)
    return (x - mean) / jnp.sqrt(var + 1e-5) * gamma + beta


def _reference_encoder(text, cond, raw_layer_params, num_heads=8):
    h = text
    for (wq, bq, wk, bk, wv, bv, wo, bo, g, b) in raw_layer_params:
        h = _reference_layer(h, cond, wq, bq, wk, bk, wv, bv, wo, bo, g, b,
                             num_heads)
    return h


if __name__ == "__main__":
    # Small shapes consistent with the module: 8 heads; the real module uses
    # hidden=1024 (hd=128, lane-aligned) -- 256 keeps the test tiny while
    # staying lane-dense on the hidden axis.
    B, Lq, Lk, H, NH, NLAYERS = 2, 8, 8, 256, 8, 2

    key = jax.random.PRNGKey(0)
    keys = jax.random.split(key, 2 + NLAYERS)

    # Round inputs/weights through bf16 so kernel and f32 reference see the
    # same parameter values (only the arithmetic paths differ).
    bf16r = lambda a: a.astype(jnp.bfloat16).astype(jnp.float32)

    text_features = bf16r(jax.random.normal(keys[0], (B, Lq, H), jnp.float32))
    condition_feats = bf16r(jax.random.normal(keys[1], (B, Lk, H), jnp.float32))

    bound = 1.0 / math.sqrt(H)
    raw_layer_params = []
    prepared_layer_params = []
    for i in range(NLAYERS):
        ks = jax.random.split(keys[2 + i], 8)
        wq = bf16r(jax.random.uniform(ks[0], (H, H), jnp.float32, -bound, bound))
        wk = bf16r(jax.random.uniform(ks[1], (H, H), jnp.float32, -bound, bound))
        wv = bf16r(jax.random.uniform(ks[2], (H, H), jnp.float32, -bound, bound))
        wo = bf16r(jax.random.uniform(ks[3], (H, H), jnp.float32, -bound, bound))
        bq = jax.random.uniform(ks[4], (H,), jnp.float32, -bound, bound)
        bk = jax.random.uniform(ks[5], (H,), jnp.float32, -bound, bound)
        bv = jax.random.uniform(ks[6], (H,), jnp.float32, -bound, bound)
        bo = jax.random.uniform(ks[7], (H,), jnp.float32, -bound, bound)
        ln_gamma = jnp.ones((H,), jnp.float32)
        ln_beta = jnp.zeros((H,), jnp.float32)
        raw_layer_params.append((wq, bq, wk, bk, wv, bv, wo, bo,
                                 ln_gamma, ln_beta))
        prepared_layer_params.append(
            prepare_layer_params(wq, bq, wk, bk, wv, bv, wo, bo,
                                 ln_gamma, ln_beta))

    out = bert_like_multimodal_encoder(text_features, condition_feats,
                                       prepared_layer_params, num_heads=NH)
    out = jax.block_until_ready(out)

    ref = _reference_encoder(text_features, condition_feats, raw_layer_params,
                             num_heads=NH)

    assert out.shape == (B, Lq, H)
    max_diff = float(jnp.max(jnp.abs(out - ref)))
    # bf16 activations end-to-end (layer boundaries, qkv, softmax weights,
    # approx EUP reciprocal) vs a pure-f32 reference -> slightly looser
    # tolerance than an f32-boundary implementation.
    assert jnp.allclose(out, ref, atol=5e-2, rtol=5e-2), (
        f"mismatch vs reference, max abs diff = {max_diff}")

    print("KERNEL_OK")
</pallas_src>

<mosaic_0001>
module attributes {stable_mosaic.version = 11 : i64} {
  func.func @_cross_attn_layer_kernel(%arg0: i32, %arg1: memref<16x256xbf16, #tpu.memory_space<vmem>>, %arg2: memref<16x256xbf16, #tpu.memory_space<vmem>>, %arg3: memref<256x256xbf16, #tpu.memory_space<vmem>>, %arg4: memref<256x256xbf16, #tpu.memory_space<vmem>>, %arg5: memref<256x256xbf16, #tpu.memory_space<vmem>>, %arg6: memref<256x256xbf16, #tpu.memory_space<vmem>>, %arg7: memref<1x256xf32, #tpu.memory_space<vmem>>, %arg8: memref<1x256xf32, #tpu.memory_space<vmem>>, %arg9: memref<1x256xf32, #tpu.memory_space<vmem>>, %arg10: memref<1x256xf32, #tpu.memory_space<vmem>>, %arg11: memref<1x256xf32, #tpu.memory_space<vmem>>, %arg12: memref<1x256xf32, #tpu.memory_space<vmem>>, %arg13: memref<16x256xbf16, #tpu.memory_space<vmem>>, %arg14: memref<16x256xbf16, #tpu.memory_space<vmem>>) attributes {dimension_semantics = [#tpu.dimension_semantics<parallel>], iteration_bounds = array<i64: 1>, scalar_prefetch = 0 : i64, scratch_operands = 1 : i64, tpu.core_type = #tpu.core_type<tc>, window_params = [{transform_indices = @transform_0, window_bounds = array<i64: 16, 256>}, {transform_indices = @transform_1, window_bounds = array<i64: 16, 256>}, {pipeline_mode = #tpu.pipeline_mode<synchronous>, transform_indices = @transform_2, window_bounds = array<i64: 256, 256>}, {pipeline_mode = #tpu.pipeline_mode<synchronous>, transform_indices = @transform_3, window_bounds = array<i64: 256, 256>}, {pipeline_mode = #tpu.pipeline_mode<synchronous>, transform_indices = @transform_4, window_bounds = array<i64: 256, 256>}, {pipeline_mode = #tpu.pipeline_mode<synchronous>, transform_indices = @transform_5, window_bounds = array<i64: 256, 256>}, {pipeline_mode = #tpu.pipeline_mode<synchronous>, transform_indices = @transform_6, window_bounds = array<i64: 1, 256>}, {pipeline_mode = #tpu.pipeline_mode<synchronous>, transform_indices = @transform_7, window_bounds = array<i64: 1, 256>}, {pipeline_mode = #tpu.pipeline_mode<synchronous>, transform_indices = @transform_8, window_bounds = array<i64: 1, 256>}, {pipeline_mode = #tpu.pipeline_mode<synchronous>, transform_indices = @transform_9, window_bounds = array<i64: 1, 256>}, {pipeline_mode = #tpu.pipeline_mode<synchronous>, transform_indices = @transform_10, window_bounds = array<i64: 1, 256>}, {pipeline_mode = #tpu.pipeline_mode<synchronous>, transform_indices = @transform_11, window_bounds = array<i64: 1, 256>}, {transform_indices = @transform_12, window_bounds = array<i64: 16, 256>}]} {
    %c0 = arith.constant 0 : index
    %c0_0 = arith.constant 0 : index
    %0 = vector.load %arg1[%c0, %c0_0] : memref<16x256xbf16, #tpu.memory_space<vmem>>, vector<16x256xbf16>
    %c0_1 = arith.constant 0 : index
    %c0_2 = arith.constant 0 : index
    %1 = vector.load %arg2[%c0_1, %c0_2] : memref<16x256xbf16, #tpu.memory_space<vmem>>, vector<16x256xbf16>
    %c0_3 = arith.constant 0 : index
    %c0_4 = arith.constant 0 : index
    %2 = vector.load %arg3[%c0_3, %c0_4] : memref<256x256xbf16, #tpu.memory_space<vmem>>, vector<256x256xbf16>
    %cst = arith.constant dense<0.000000e+00> : vector<16x256xf32>
    %3 = tpu.matmul %0, %2, %cst {dimension_numbers = #tpu.dot_dimension_numbers<[1], [0], [0], [1], [0, 0, 1, 1], [], []>} : vector<16x256xbf16>, vector<256x256xbf16>, vector<16x256xf32> -> vector<16x256xf32>
    %c0_5 = arith.constant 0 : index
    %c0_6 = arith.constant 0 : index
    %4 = vector.load %arg7[%c0_5, %c0_6] : memref<1x256xf32, #tpu.memory_space<vmem>>, vector<1x256xf32>
    %5 = vector.broadcast %4 : vector<1x256xf32> to vector<16x256xf32>
    %6 = arith.addf %3, %5 : vector<16x256xf32>
    %cst_7 = arith.constant 0.176776692 : f32
    %7 = vector.broadcast %cst_7 : f32 to vector<16x256xf32>
    %8 = arith.mulf %6, %7 : vector<16x256xf32>
    %c0_8 = arith.constant 0 : index
    %c0_9 = arith.constant 0 : index
    %9 = vector.load %arg4[%c0_8, %c0_9] : memref<256x256xbf16, #tpu.memory_space<vmem>>, vector<256x256xbf16>
    %cst_10 = arith.constant dense<0.000000e+00> : vector<16x256xf32>
    %10 = tpu.matmul %1, %9, %cst_10 {dimension_numbers = #tpu.dot_dimension_numbers<[1], [0], [0], [1], [0, 0, 1, 1], [], []>} : vector<16x256xbf16>, vector<256x256xbf16>, vector<16x256xf32> -> vector<16x256xf32>
    %c0_11 = arith.constant 0 : index
    %c0_12 = arith.constant 0 : index
    %11 = vector.load %arg8[%c0_11, %c0_12] : memref<1x256xf32, #tpu.memory_space<vmem>>, vector<1x256xf32>
    %12 = vector.broadcast %11 : vector<1x256xf32> to vector<16x256xf32>
    %13 = arith.addf %10, %12 : vector<16x256xf32>
    %c0_13 = arith.constant 0 : index
    %c0_14 = arith.constant 0 : index
    %14 = vector.load %arg5[%c0_13, %c0_14] : memref<256x256xbf16, #tpu.memory_space<vmem>>, vector<256x256xbf16>
    %cst_15 = arith.constant dense<0.000000e+00> : vector<16x256xf32>
    %15 = tpu.matmul %1, %14, %cst_15 {dimension_numbers = #tpu.dot_dimension_numbers<[1], [0], [0], [1], [0, 0, 1, 1], [], []>} : vector<16x256xbf16>, vector<256x256xbf16>, vector<16x256xf32> -> vector<16x256xf32>
    %c0_16 = arith.constant 0 : index
    %c0_17 = arith.constant 0 : index
    %16 = vector.load %arg9[%c0_16, %c0_17] : memref<1x256xf32, #tpu.memory_space<vmem>>, vector<1x256xf32>
    %17 = vector.broadcast %16 : vector<1x256xf32> to vector<16x256xf32>
    %18 = arith.addf %15, %17 : vector<16x256xf32>
    %19 = arith.truncf %8 : vector<16x256xf32> to vector<16x256xbf16>
    %20 = arith.truncf %13 : vector<16x256xf32> to vector<16x256xbf16>
    %21 = arith.truncf %18 : vector<16x256xf32> to vector<16x256xbf16>
    %22 = vector.extract_strided_slice %19 {offsets = [0, 0], sizes = [8, 256], strides = [1, 1]} : vector<16x256xbf16> to vector<8x256xbf16>
    %23 = vector.extract_strided_slice %20 {offsets = [0, 0], sizes = [8, 256], strides = [1, 1]} : vector<16x256xbf16> to vector<8x256xbf16>
    %24 = vector.extract_strided_slice %21 {offsets = [0, 0], sizes = [8, 256], strides = [1, 1]} : vector<16x256xbf16> to vector<8x256xbf16>
    %25 = vector.extract_strided_slice %22 {offsets = [0, 0], sizes = [8, 32], strides = [1, 1]} : vector<8x256xbf16> to vector<8x32xbf16>
    %26 = vector.extract_strided_slice %23 {offsets = [0, 0], sizes = [8, 32], strides = [1, 1]} : vector<8x256xbf16> to vector<8x32xbf16>
    %cst_18 = arith.constant dense<0.000000e+00> : vector<8x8xf32>
    %27 = tpu.matmul %25, %26, %cst_18 {dimension_numbers = #tpu.dot_dimension_numbers<[1], [1], [0], [0], [0, 0, 1, 0], [], []>} : vector<8x32xbf16>, vector<8x32xbf16>, vector<8x8xf32> -> vector<8x8xf32>
    %cst_19 = arith.constant dense<0xFF800000> : vector<8xf32>
    %28 = vector.multi_reduction <maximumf>, %27, %cst_19 [1] : vector<8x8xf32> to vector<8xf32>
    %29 = vector.shape_cast %28 : vector<8xf32> to vector<8x1xf32>
    %30 = vector.broadcast %29 : vector<8x1xf32> to vector<8x8xf32>
    %31 = arith.subf %27, %30 : vector<8x8xf32>
    %32 = math.exp %31 : vector<8x8xf32>
    %cst_20 = arith.constant dense<0.000000e+00> : vector<8xf32>
    %33 = vector.multi_reduction <add>, %32, %cst_20 [1] : vector<8x8xf32> to vector<8xf32>
    %34 = vector.shape_cast %33 : vector<8xf32> to vector<8x1xf32>
    %35 = tpu.reciprocal %34 {approx = true} : vector<8x1xf32> -> vector<8x1xf32>
    %36 = arith.truncf %32 : vector<8x8xf32> to vector<8x8xbf16>
    %37 = vector.extract_strided_slice %24 {offsets = [0, 0], sizes = [8, 32], strides = [1, 1]} : vector<8x256xbf16> to vector<8x32xbf16>
    %cst_21 = arith.constant dense<0.000000e+00> : vector<8x32xf32>
    %38 = tpu.matmul %36, %37, %cst_21 {dimension_numbers = #tpu.dot_dimension_numbers<[1], [0], [0], [1], [0, 0, 1, 1], [], []>} : vector<8x8xbf16>, vector<8x32xbf16>, vector<8x32xf32> -> vector<8x32xf32>
    %39 = vector.broadcast %35 : vector<8x1xf32> to vector<8x32xf32>
    %40 = arith.mulf %38, %39 : vector<8x32xf32>
    %41 = arith.truncf %40 : vector<8x32xf32> to vector<8x32xbf16>
    %c0_22 = arith.constant 0 : index
    %c0_23 = arith.constant 0 : index
    %42 = vector.load %arg14[%c0_22, %c0_23] : memref<16x256xbf16, #tpu.memory_space<vmem>>, vector<8x32xbf16>
    tpu.vector_store %arg14[%c0_22, %c0_23], %41 {strides = array<i32>} : memref<16x256xbf16, #tpu.memory_space<vmem>>, vector<8x32xbf16>,
    %43 = vector.extract_strided_slice %22 {offsets = [0, 32], sizes = [8, 32], strides = [1, 1]} : vector<8x256xbf16> to vector<8x32xbf16>
    %44 = vector.extract_strided_slice %23 {offsets = [0, 32], sizes = [8, 32], strides = [1, 1]} : vector<8x256xbf16> to vector<8x32xbf16>
    %cst_24 = arith.constant dense<0.000000e+00> : vector<8x8xf32>
    %45 = tpu.matmul %43, %44, %cst_24 {dimension_numbers = #tpu.dot_dimension_numbers<[1], [1], [0], [0], [0, 0, 1, 0], [], []>} : vector<8x32xbf16>, vector<8x32xbf16>, vector<8x8xf32> -> vector<8x8xf32>
    %cst_25 = arith.constant dense<0xFF800000> : vector<8xf32>
    %46 = vector.multi_reduction <maximumf>, %45, %cst_25 [1] : vector<8x8xf32> to vector<8xf32>
    %47 = vector.shape_cast %46 : vector<8xf32> to vector<8x1xf32>
    %48 = vector.broadcast %47 : vector<8x1xf32> to vector<8x8xf32>
    %49 = arith.subf %45, %48 : vector<8x8xf32>
    %50 = math.exp %49 : vector<8x8xf32>
    %cst_26 = arith.constant dense<0.000000e+00> : vector<8xf32>
    %51 = vector.multi_reduction <add>, %50, %cst_26 [1] : vector<8x8xf32> to vector<8xf32>
    %52 = vector.shape_cast %51 : vector<8xf32> to vector<8x1xf32>
    %53 = tpu.reciprocal %52 {approx = true} : vector<8x1xf32> -> vector<8x1xf32>
    %54 = arith.truncf %50 : vector<8x8xf32> to vector<8x8xbf16>
    %55 = vector.extract_strided_slice %24 {offsets = [0, 32], sizes = [8, 32], strides = [1, 1]} : vector<8x256xbf16> to vector<8x32xbf16>
    %cst_27 = arith.constant dense<0.000000e+00> : vector<8x32xf32>
    %56 = tpu.matmul %54, %55, %cst_27 {dimension_numbers = #tpu.dot_dimension_numbers<[1], [0], [0], [1], [0, 0, 1, 1], [], []>} : vector<8x8xbf16>, vector<8x32xbf16>, vector<8x32xf32> -> vector<8x32xf32>
    %57 = vector.broadcast %53 : vector<8x1xf32> to vector<8x32xf32>
    %58 = arith.mulf %56, %57 : vector<8x32xf32>
    %59 = arith.truncf %58 : vector<8x32xf32> to vector<8x32xbf16>
    %c0_28 = arith.constant 0 : index
    %c32 = arith.constant 32 : index
    %60 = vector.load %arg14[%c0_28, %c32] : memref<16x256xbf16, #tpu.memory_space<vmem>>, vector<8x32xbf16>
    tpu.vector_store %arg14[%c0_28, %c32], %59 {strides = array<i32>} : memref<16x256xbf16, #tpu.memory_space<vmem>>, vector<8x32xbf16>,
    %61 = vector.extract_strided_slice %22 {offsets = [0, 64], sizes = [8, 32], strides = [1, 1]} : vector<8x256xbf16> to vector<8x32xbf16>
    %62 = vector.extract_strided_slice %23 {offsets = [0, 64], sizes = [8, 32], strides = [1, 1]} : vector<8x256xbf16> to vector<8x32xbf16>
    %cst_29 = arith.constant dense<0.000000e+00> : vector<8x8xf32>
    %63 = tpu.matmul %61, %62, %cst_29 {dimension_numbers = #tpu.dot_dimension_numbers<[1], [1], [0], [0], [0, 0, 1, 0], [], []>} : vector<8x32xbf16>, vector<8x32xbf16>, vector<8x8xf32> -> vector<8x8xf32>
    %cst_30 = arith.constant dense<0xFF800000> : vector<8xf32>
    %64 = vector.multi_reduction <maximumf>, %63, %cst_30 [1] : vector<8x8xf32> to vector<8xf32>
    %65 = vector.shape_cast %64 : vector<8xf32> to vector<8x1xf32>
    %66 = vector.broadcast %65 : vector<8x1xf32> to vector<8x8xf32>
    %67 = arith.subf %63, %66 : vector<8x8xf32>
    %68 = math.exp %67 : vector<8x8xf32>
    %cst_31 = arith.constant dense<0.000000e+00> : vector<8xf32>
    %69 = vector.multi_reduction <add>, %68, %cst_31 [1] : vector<8x8xf32> to vector<8xf32>
    %70 = vector.shape_cast %69 : vector<8xf32> to vector<8x1xf32>
    %71 = tpu.reciprocal %70 {approx = true} : vector<8x1xf32> -> vector<8x1xf32>
    %72 = arith.truncf %68 : vector<8x8xf32> to vector<8x8xbf16>
    %73 = vector.extract_strided_slice %24 {offsets = [0, 64], sizes = [8, 32], strides = [1, 1]} : vector<8x256xbf16> to vector<8x32xbf16>
    %cst_32 = arith.constant dense<0.000000e+00> : vector<8x32xf32>
    %74 = tpu.matmul %72, %73, %cst_32 {dimension_numbers = #tpu.dot_dimension_numbers<[1], [0], [0], [1], [0, 0, 1, 1], [], []>} : vector<8x8xbf16>, vector<8x32xbf16>, vector<8x32xf32> -> vector<8x32xf32>
    %75 = vector.broadcast %71 : vector<8x1xf32> to vector<8x32xf32>
    %76 = arith.mulf %74, %75 : vector<8x32xf32>
    %77 = arith.truncf %76 : vector<8x32xf32> to vector<8x32xbf16>
    %c0_33 = arith.constant 0 : index
    %c64 = arith.constant 64 : index
    %78 = vector.load %arg14[%c0_33, %c64] : memref<16x256xbf16, #tpu.memory_space<vmem>>, vector<8x32xbf16>
    tpu.vector_store %arg14[%c0_33, %c64], %77 {strides = array<i32>} : memref<16x256xbf16, #tpu.memory_space<vmem>>, vector<8x32xbf16>,
    %79 = vector.extract_strided_slice %22 {offsets = [0, 96], sizes = [8, 32], strides = [1, 1]} : vector<8x256xbf16> to vector<8x32xbf16>
    %80 = vector.extract_strided_slice %23 {offsets = [0, 96], sizes = [8, 32], strides = [1, 1]} : vector<8x256xbf16> to vector<8x32xbf16>
    %cst_34 = arith.constant dense<0.000000e+00> : vector<8x8xf32>
    %81 = tpu.matmul %79, %80, %cst_34 {dimension_numbers = #tpu.dot_dimension_numbers<[1], [1], [0], [0], [0, 0, 1, 0], [], []>} : vector<8x32xbf16>, vector<8x32xbf16>, vector<8x8xf32> -> vector<8x8xf32>
    %cst_35 = arith.constant dense<0xFF800000> : vector<8xf32>
    %82 = vector.multi_reduction <maximumf>, %81, %cst_35 [1] : vector<8x8xf32> to vector<8xf32>
    %83 = vector.shape_cast %82 : vector<8xf32> to vector<8x1xf32>
    %84 = vector.broadcast %83 : vector<8x1xf32> to vector<8x8xf32>
    %85 = arith.subf %81, %84 : vector<8x8xf32>
    %86 = math.exp %85 : vector<8x8xf32>
    %cst_36 = arith.constant dense<0.000000e+00> : vector<8xf32>
    %87 = vector.multi_reduction <add>, %86, %cst_36 [1] : vector<8x8xf32> to vector<8xf32>
    %88 = vector.shape_cast %87 : vector<8xf32> to vector<8x1xf32>
    %89 = tpu.reciprocal %88 {approx = true} : vector<8x1xf32> -> vector<8x1xf32>
    %90 = arith.truncf %86 : vector<8x8xf32> to vector<8x8xbf16>
    %91 = vector.extract_strided_slice %24 {offsets = [0, 96], sizes = [8, 32], strides = [1, 1]} : vector<8x256xbf16> to vector<8x32xbf16>
    %cst_37 = arith.constant dense<0.000000e+00> : vector<8x32xf32>
    %92 = tpu.matmul %90, %91, %cst_37 {dimension_numbers = #tpu.dot_dimension_numbers<[1], [0], [0], [1], [0, 0, 1, 1], [], []>} : vector<8x8xbf16>, vector<8x32xbf16>, vector<8x32xf32> -> vector<8x32xf32>
    %93 = vector.broadcast %89 : vector<8x1xf32> to vector<8x32xf32>
    %94 = arith.mulf %92, %93 : vector<8x32xf32>
    %95 = arith.truncf %94 : vector<8x32xf32> to vector<8x32xbf16>
    %c0_38 = arith.constant 0 : index
    %c96 = arith.constant 96 : index
    %96 = vector.load %arg14[%c0_38, %c96] : memref<16x256xbf16, #tpu.memory_space<vmem>>, vector<8x32xbf16>
    tpu.vector_store %arg14[%c0_38, %c96], %95 {strides = array<i32>} : memref<16x256xbf16, #tpu.memory_space<vmem>>, vector<8x32xbf16>,
    %97 = vector.extract_strided_slice %22 {offsets = [0, 128], sizes = [8, 32], strides = [1, 1]} : vector<8x256xbf16> to vector<8x32xbf16>
    %98 = vector.extract_strided_slice %23 {offsets = [0, 128], sizes = [8, 32], strides = [1, 1]} : vector<8x256xbf16> to vector<8x32xbf16>
    %cst_39 = arith.constant dense<0.000000e+00> : vector<8x8xf32>
    %99 = tpu.matmul %97, %98, %cst_39 {dimension_numbers = #tpu.dot_dimension_numbers<[1], [1], [0], [0], [0, 0, 1, 0], [], []>} : vector<8x32xbf16>, vector<8x32xbf16>, vector<8x8xf32> -> vector<8x8xf32>
    %cst_40 = arith.constant dense<0xFF800000> : vector<8xf32>
    %100 = vector.multi_reduction <maximumf>, %99, %cst_40 [1] : vector<8x8xf32> to vector<8xf32>
    %101 = vector.shape_cast %100 : vector<8xf32> to vector<8x1xf32>
    %102 = vector.broadcast %101 : vector<8x1xf32> to vector<8x8xf32>
    %103 = arith.subf %99, %102 : vector<8x8xf32>
    %104 = math.exp %103 : vector<8x8xf32>
    %cst_41 = arith.constant dense<0.000000e+00> : vector<8xf32>
    %105 = vector.multi_reduction <add>, %104, %cst_41 [1] : vector<8x8xf32> to vector<8xf32>
    %106 = vector.shape_cast %105 : vector<8xf32> to vector<8x1xf32>
    %107 = tpu.reciprocal %106 {approx = true} : vector<8x1xf32> -> vector<8x1xf32>
    %108 = arith.truncf %104 : vector<8x8xf32> to vector<8x8xbf16>
    %109 = vector.extract_strided_slice %24 {offsets = [0, 128], sizes = [8, 32], strides = [1, 1]} : vector<8x256xbf16> to vector<8x32xbf16>
    %cst_42 = arith.constant dense<0.000000e+00> : vector<8x32xf32>
    %110 = tpu.matmul %108, %109, %cst_42 {dimension_numbers = #tpu.dot_dimension_numbers<[1], [0], [0], [1], [0, 0, 1, 1], [], []>} : vector<8x8xbf16>, vector<8x32xbf16>, vector<8x32xf32> -> vector<8x32xf32>
    %111 = vector.broadcast %107 : vector<8x1xf32> to vector<8x32xf32>
    %112 = arith.mulf %110, %111 : vector<8x32xf32>
    %113 = arith.truncf %112 : vector<8x32xf32> to vector<8x32xbf16>
    %c0_43 = arith.constant 0 : index
    %c128 = arith.constant 128 : index
    %114 = vector.load %arg14[%c0_43, %c128] : memref<16x256xbf16, #tpu.memory_space<vmem>>, vector<8x32xbf16>
    tpu.vector_store %arg14[%c0_43, %c128], %113 {strides = array<i32>} : memref<16x256xbf16, #tpu.memory_space<vmem>>, vector<8x32xbf16>,
    %115 = vector.extract_strided_slice %22 {offsets = [0, 160], sizes = [8, 32], strides = [1, 1]} : vector<8x256xbf16> to vector<8x32xbf16>
    %116 = vector.extract_strided_slice %23 {offsets = [0, 160], sizes = [8, 32], strides = [1, 1]} : vector<8x256xbf16> to vector<8x32xbf16>
    %cst_44 = arith.constant dense<0.000000e+00> : vector<8x8xf32>
    %117 = tpu.matmul %115, %116, %cst_44 {dimension_numbers = #tpu.dot_dimension_numbers<[1], [1], [0], [0], [0, 0, 1, 0], [], []>} : vector<8x32xbf16>, vector<8x32xbf16>, vector<8x8xf32> -> vector<8x8xf32>
    %cst_45 = arith.constant dense<0xFF800000> : vector<8xf32>
    %118 = vector.multi_reduction <maximumf>, %117, %cst_45 [1] : vector<8x8xf32> to vector<8xf32>
    %119 = vector.shape_cast %118 : vector<8xf32> to vector<8x1xf32>
    %120 = vector.broadcast %119 : vector<8x1xf32> to vector<8x8xf32>
    %121 = arith.subf %117, %120 : vector<8x8xf32>
    %122 = math.exp %121 : vector<8x8xf32>
    %cst_46 = arith.constant dense<0.000000e+00> : vector<8xf32>
    %123 = vector.multi_reduction <add>, %122, %cst_46 [1] : vector<8x8xf32> to vector<8xf32>
    %124 = vector.shape_cast %123 : vector<8xf32> to vector<8x1xf32>
    %125 = tpu.reciprocal %124 {approx = true} : vector<8x1xf32> -> vector<8x1xf32>
    %126 = arith.truncf %122 : vector<8x8xf32> to vector<8x8xbf16>
    %127 = vector.extract_strided_slice %24 {offsets = [0, 160], sizes = [8, 32], strides = [1, 1]} : vector<8x256xbf16> to vector<8x32xbf16>
    %cst_47 = arith.constant dense<0.000000e+00> : vector<8x32xf32>
    %128 = tpu.matmul %126, %127, %cst_47 {dimension_numbers = #tpu.dot_dimension_numbers<[1], [0], [0], [1], [0, 0, 1, 1], [], []>} : vector<8x8xbf16>, vector<8x32xbf16>, vector<8x32xf32> -> vector<8x32xf32>
    %129 = vector.broadcast %125 : vector<8x1xf32> to vector<8x32xf32>
    %130 = arith.mulf %128, %129 : vector<8x32xf32>
    %131 = arith.truncf %130 : vector<8x32xf32> to vector<8x32xbf16>
    %c0_48 = arith.constant 0 : index
    %c160 = arith.constant 160 : index
    %132 = vector.load %arg14[%c0_48, %c160] : memref<16x256xbf16, #tpu.memory_space<vmem>>, vector<8x32xbf16>
    tpu.vector_store %arg14[%c0_48, %c160], %131 {strides = array<i32>} : memref<16x256xbf16, #tpu.memory_space<vmem>>, vector<8x32xbf16>,
    %133 = vector.extract_strided_slice %22 {offsets = [0, 192], sizes = [8, 32], strides = [1, 1]} : vector<8x256xbf16> to vector<8x32xbf16>
    %134 = vector.extract_strided_slice %23 {offsets = [0, 192], sizes = [8, 32], strides = [1, 1]} : vector<8x256xbf16> to vector<8x32xbf16>
    %cst_49 = arith.constant dense<0.000000e+00> : vector<8x8xf32>
    %135 = tpu.matmul %133, %134, %cst_49 {dimension_numbers = #tpu.dot_dimension_numbers<[1], [1], [0], [0], [0, 0, 1, 0], [], []>} : vector<8x32xbf16>, vector<8x32xbf16>, vector<8x8xf32> -> vector<8x8xf32>
    %cst_50 = arith.constant dense<0xFF800000> : vector<8xf32>
    %136 = vector.multi_reduction <maximumf>, %135, %cst_50 [1] : vector<8x8xf32> to vector<8xf32>
    %137 = vector.shape_cast %136 : vector<8xf32> to vector<8x1xf32>
    %138 = vector.broadcast %137 : vector<8x1xf32> to vector<8x8xf32>
    %139 = arith.subf %135, %138 : vector<8x8xf32>
    %140 = math.exp %139 : vector<8x8xf32>
    %cst_51 = arith.constant dense<0.000000e+00> : vector<8xf32>
    %141 = vector.multi_reduction <add>, %140, %cst_51 [1] : vector<8x8xf32> to vector<8xf32>
    %142 = vector.shape_cast %141 : vector<8xf32> to vector<8x1xf32>
    %143 = tpu.reciprocal %142 {approx = true} : vector<8x1xf32> -> vector<8x1xf32>
    %144 = arith.truncf %140 : vector<8x8xf32> to vector<8x8xbf16>
    %145 = vector.extract_strided_slice %24 {offsets = [0, 192], sizes = [8, 32], strides = [1, 1]} : vector<8x256xbf16> to vector<8x32xbf16>
    %cst_52 = arith.constant dense<0.000000e+00> : vector<8x32xf32>
    %146 = tpu.matmul %144, %145, %cst_52 {dimension_numbers = #tpu.dot_dimension_numbers<[1], [0], [0], [1], [0, 0, 1, 1], [], []>} : vector<8x8xbf16>, vector<8x32xbf16>, vector<8x32xf32> -> vector<8x32xf32>
    %147 = vector.broadcast %143 : vector<8x1xf32> to vector<8x32xf32>
    %148 = arith.mulf %146, %147 : vector<8x32xf32>
    %149 = arith.truncf %148 : vector<8x32xf32> to vector<8x32xbf16>
    %c0_53 = arith.constant 0 : index
    %c192 = arith.constant 192 : index
    %150 = vector.load %arg14[%c0_53, %c192] : memref<16x256xbf16, #tpu.memory_space<vmem>>, vector<8x32xbf16>
    tpu.vector_store %arg14[%c0_53, %c192], %149 {strides = array<i32>} : memref<16x256xbf16, #tpu.memory_space<vmem>>, vector<8x32xbf16>,
    %151 = vector.extract_strided_slice %22 {offsets = [0, 224], sizes = [8, 32], strides = [1, 1]} : vector<8x256xbf16> to vector<8x32xbf16>
    %152 = vector.extract_strided_slice %23 {offsets = [0, 224], sizes = [8, 32], strides = [1, 1]} : vector<8x256xbf16> to vector<8x32xbf16>
    %cst_54 = arith.constant dense<0.000000e+00> : vector<8x8xf32>
    %153 = tpu.matmul %151, %152, %cst_54 {dimension_numbers = #tpu.dot_dimension_numbers<[1], [1], [0], [0], [0, 0, 1, 0], [], []>} : vector<8x32xbf16>, vector<8x32xbf16>, vector<8x8xf32> -> vector<8x8xf32>
    %cst_55 = arith.constant dense<0xFF800000> : vector<8xf32>
    %154 = vector.multi_reduction <maximumf>, %153, %cst_55 [1] : vector<8x8xf32> to vector<8xf32>
    %155 = vector.shape_cast %154 : vector<8xf32> to vector<8x1xf32>
    %156 = vector.broadcast %155 : vector<8x1xf32> to vector<8x8xf32>
    %157 = arith.subf %153, %156 : vector<8x8xf32>
    %158 = math.exp %157 : vector<8x8xf32>
    %cst_56 = arith.constant dense<0.000000e+00> : vector<8xf32>
    %159 = vector.multi_reduction <add>, %158, %cst_56 [1] : vector<8x8xf32> to vector<8xf32>
    %160 = vector.shape_cast %159 : vector<8xf32> to vector<8x1xf32>
    %161 = tpu.reciprocal %160 {approx = true} : vector<8x1xf32> -> vector<8x1xf32>
    %162 = arith.truncf %158 : vector<8x8xf32> to vector<8x8xbf16>
    %163 = vector.extract_strided_slice %24 {offsets = [0, 224], sizes = [8, 32], strides = [1, 1]} : vector<8x256xbf16> to vector<8x32xbf16>
    %cst_57 = arith.constant dense<0.000000e+00> : vector<8x32xf32>
    %164 = tpu.matmul %162, %163, %cst_57 {dimension_numbers = #tpu.dot_dimension_numbers<[1], [0], [0], [1], [0, 0, 1, 1], [], []>} : vector<8x8xbf16>, vector<8x32xbf16>, vector<8x32xf32> -> vector<8x32xf32>
    %165 = vector.broadcast %161 : vector<8x1xf32> to vector<8x32xf32>
    %166 = arith.mulf %164, %165 : vector<8x32xf32>
    %167 = arith.truncf %166 : vector<8x32xf32> to vector<8x32xbf16>
    %c0_58 = arith.constant 0 : index
    %c224 = arith.constant 224 : index
    %168 = vector.load %arg14[%c0_58, %c224] : memref<16x256xbf16, #tpu.memory_space<vmem>>, vector<8x32xbf16>
    tpu.vector_store %arg14[%c0_58, %c224], %167 {strides = array<i32>} : memref<16x256xbf16, #tpu.memory_space<vmem>>, vector<8x32xbf16>,
    %169 = vector.extract_strided_slice %19 {offsets = [8, 0], sizes = [8, 256], strides = [1, 1]} : vector<16x256xbf16> to vector<8x256xbf16>
    %170 = vector.extract_strided_slice %20 {offsets = [8, 0], sizes = [8, 256], strides = [1, 1]} : vector<16x256xbf16> to vector<8x256xbf16>
    %171 = vector.extract_strided_slice %21 {offsets = [8, 0], sizes = [8, 256], strides = [1, 1]} : vector<16x256xbf16> to vector<8x256xbf16>
    %172 = vector.extract_strided_slice %169 {offsets = [0, 0], sizes = [8, 32], strides = [1, 1]} : vector<8x256xbf16> to vector<8x32xbf16>
    %173 = vector.extract_strided_slice %170 {offsets = [0, 0], sizes = [8, 32], strides = [1, 1]} : vector<8x256xbf16> to vector<8x32xbf16>
    %cst_59 = arith.constant dense<0.000000e+00> : vector<8x8xf32>
    %174 = tpu.matmul %172, %173, %cst_59 {dimension_numbers = #tpu.dot_dimension_numbers<[1], [1], [0], [0], [0, 0, 1, 0], [], []>} : vector<8x32xbf16>, vector<8x32xbf16>, vector<8x8xf32> -> vector<8x8xf32>
    %cst_60 = arith.constant dense<0xFF800000> : vector<8xf32>
    %175 = vector.multi_reduction <maximumf>, %174, %cst_60 [1] : vector<8x8xf32> to vector<8xf32>
    %176 = vector.shape_cast %175 : vector<8xf32> to vector<8x1xf32>
    %177 = vector.broadcast %176 : vector<8x1xf32> to vector<8x8xf32>
    %178 = arith.subf %174, %177 : vector<8x8xf32>
    %179 = math.exp %178 : vector<8x8xf32>
    %cst_61 = arith.constant dense<0.000000e+00> : vector<8xf32>
    %180 = vector.multi_reduction <add>, %179, %cst_61 [1] : vector<8x8xf32> to vector<8xf32>
    %181 = vector.shape_cast %180 : vector<8xf32> to vector<8x1xf32>
    %182 = tpu.reciprocal %181 {approx = true} : vector<8x1xf32> -> vector<8x1xf32>
    %183 = arith.truncf %179 : vector<8x8xf32> to vector<8x8xbf16>
    %184 = vector.extract_strided_slice %171 {offsets = [0, 0], sizes = [8, 32], strides = [1, 1]} : vector<8x256xbf16> to vector<8x32xbf16>
    %cst_62 = arith.constant dense<0.000000e+00> : vector<8x32xf32>
    %185 = tpu.matmul %183, %184, %cst_62 {dimension_numbers = #tpu.dot_dimension_numbers<[1], [0], [0], [1], [0, 0, 1, 1], [], []>} : vector<8x8xbf16>, vector<8x32xbf16>, vector<8x32xf32> -> vector<8x32xf32>
    %186 = vector.broadcast %182 : vector<8x1xf32> to vector<8x32xf32>
    %187 = arith.mulf %185, %186 : vector<8x32xf32>
    %188 = arith.truncf %187 : vector<8x32xf32> to vector<8x32xbf16>
    %c8 = arith.constant 8 : index
    %c0_63 = arith.constant 0 : index
    %189 = vector.load %arg14[%c8, %c0_63] : memref<16x256xbf16, #tpu.memory_space<vmem>>, vector<8x32xbf16>
    tpu.vector_store %arg14[%c8, %c0_63], %188 {strides = array<i32>} : memref<16x256xbf16, #tpu.memory_space<vmem>>, vector<8x32xbf16>,
    %190 = vector.extract_strided_slice %169 {offsets = [0, 32], sizes = [8, 32], strides = [1, 1]} : vector<8x256xbf16> to vector<8x32xbf16>
    %191 = vector.extract_strided_slice %170 {offsets = [0, 32], sizes = [8, 32], strides = [1, 1]} : vector<8x256xbf16> to vector<8x32xbf16>
    %cst_64 = arith.constant dense<0.000000e+00> : vector<8x8xf32>
    %192 = tpu.matmul %190, %191, %cst_64 {dimension_numbers = #tpu.dot_dimension_numbers<[1], [1], [0], [0], [0, 0, 1, 0], [], []>} : vector<8x32xbf16>, vector<8x32xbf16>, vector<8x8xf32> -> vector<8x8xf32>
    %cst_65 = arith.constant dense<0xFF800000> : vector<8xf32>
    %193 = vector.multi_reduction <maximumf>, %192, %cst_65 [1] : vector<8x8xf32> to vector<8xf32>
    %194 = vector.shape_cast %193 : vector<8xf32> to vector<8x1xf32>
    %195 = vector.broadcast %194 : vector<8x1xf32> to vector<8x8xf32>
    %196 = arith.subf %192, %195 : vector<8x8xf32>
    %197 = math.exp %196 : vector<8x8xf32>
    %cst_66 = arith.constant dense<0.000000e+00> : vector<8xf32>
    %198 = vector.multi_reduction <add>, %197, %cst_66 [1] : vector<8x8xf32> to vector<8xf32>
    %199 = vector.shape_cast %198 : vector<8xf32> to vector<8x1xf32>
    %200 = tpu.reciprocal %199 {approx = true} : vector<8x1xf32> -> vector<8x1xf32>
    %201 = arith.truncf %197 : vector<8x8xf32> to vector<8x8xbf16>
    %202 = vector.extract_strided_slice %171 {offsets = [0, 32], sizes = [8, 32], strides = [1, 1]} : vector<8x256xbf16> to vector<8x32xbf16>
    %cst_67 = arith.constant dense<0.000000e+00> : vector<8x32xf32>
    %203 = tpu.matmul %201, %202, %cst_67 {dimension_numbers = #tpu.dot_dimension_numbers<[1], [0], [0], [1], [0, 0, 1, 1], [], []>} : vector<8x8xbf16>, vector<8x32xbf16>, vector<8x32xf32> -> vector<8x32xf32>
    %204 = vector.broadcast %200 : vector<8x1xf32> to vector<8x32xf32>
    %205 = arith.mulf %203, %204 : vector<8x32xf32>
    %206 = arith.truncf %205 : vector<8x32xf32> to vector<8x32xbf16>
    %c8_68 = arith.constant 8 : index
    %c32_69 = arith.constant 32 : index
    %207 = vector.load %arg14[%c8_68, %c32_69] : memref<16x256xbf16, #tpu.memory_space<vmem>>, vector<8x32xbf16>
    tpu.vector_store %arg14[%c8_68, %c32_69], %206 {strides = array<i32>} : memref<16x256xbf16, #tpu.memory_space<vmem>>, vector<8x32xbf16>,
    %208 = vector.extract_strided_slice %169 {offsets = [0, 64], sizes = [8, 32], strides = [1, 1]} : vector<8x256xbf16> to vector<8x32xbf16>
    %209 = vector.extract_strided_slice %170 {offsets = [0, 64], sizes = [8, 32], strides = [1, 1]} : vector<8x256xbf16> to vector<8x32xbf16>
    %cst_70 = arith.constant dense<0.000000e+00> : vector<8x8xf32>
    %210 = tpu.matmul %208, %209, %cst_70 {dimension_numbers = #tpu.dot_dimension_numbers<[1], [1], [0], [0], [0, 0, 1, 0], [], []>} : vector<8x32xbf16>, vector<8x32xbf16>, vector<8x8xf32> -> vector<8x8xf32>
    %cst_71 = arith.constant dense<0xFF800000> : vector<8xf32>
    %211 = vector.multi_reduction <maximumf>, %210, %cst_71 [1] : vector<8x8xf32> to vector<8xf32>
    %212 = vector.shape_cast %211 : vector<8xf32> to vector<8x1xf32>
    %213 = vector.broadcast %212 : vector<8x1xf32> to vector<8x8xf32>
    %214 = arith.subf %210, %213 : vector<8x8xf32>
    %215 = math.exp %214 : vector<8x8xf32>
    %cst_72 = arith.constant dense<0.000000e+00> : vector<8xf32>
    %216 = vector.multi_reduction <add>, %215, %cst_72 [1] : vector<8x8xf32> to vector<8xf32>
    %217 = vector.shape_cast %216 : vector<8xf32> to vector<8x1xf32>
    %218 = tpu.reciprocal %217 {approx = true} : vector<8x1xf32> -> vector<8x1xf32>
    %219 = arith.truncf %215 : vector<8x8xf32> to vector<8x8xbf16>
    %220 = vector.extract_strided_slice %171 {offsets = [0, 64], sizes = [8, 32], strides = [1, 1]} : vector<8x256xbf16> to vector<8x32xbf16>
    %cst_73 = arith.constant dense<0.000000e+00> : vector<8x32xf32>
    %221 = tpu.matmul %219, %220, %cst_73 {dimension_numbers = #tpu.dot_dimension_numbers<[1], [0], [0], [1], [0, 0, 1, 1], [], []>} : vector<8x8xbf16>, vector<8x32xbf16>, vector<8x32xf32> -> vector<8x32xf32>
    %222 = vector.broadcast %218 : vector<8x1xf32> to vector<8x32xf32>
    %223 = arith.mulf %221, %222 : vector<8x32xf32>
    %224 = arith.truncf %223 : vector<8x32xf32> to vector<8x32xbf16>
    %c8_74 = arith.constant 8 : index
    %c64_75 = arith.constant 64 : index
    %225 = vector.load %arg14[%c8_74, %c64_75] : memref<16x256xbf16, #tpu.memory_space<vmem>>, vector<8x32xbf16>
    tpu.vector_store %arg14[%c8_74, %c64_75], %224 {strides = array<i32>} : memref<16x256xbf16, #tpu.memory_space<vmem>>, vector<8x32xbf16>,
    %226 = vector.extract_strided_slice %169 {offsets = [0, 96], sizes = [8, 32], strides = [1, 1]} : vector<8x256xbf16> to vector<8x32xbf16>
    %227 = vector.extract_strided_slice %170 {offsets = [0, 96], sizes = [8, 32], strides = [1, 1]} : vector<8x256xbf16> to vector<8x32xbf16>
    %cst_76 = arith.constant dense<0.000000e+00> : vector<8x8xf32>
    %228 = tpu.matmul %226, %227, %cst_76 {dimension_numbers = #tpu.dot_dimension_numbers<[1], [1], [0], [0], [0, 0, 1, 0], [], []>} : vector<8x32xbf16>, vector<8x32xbf16>, vector<8x8xf32> -> vector<8x8xf32>
    %cst_77 = arith.constant dense<0xFF800000> : vector<8xf32>
    %229 = vector.multi_reduction <maximumf>, %228, %cst_77 [1] : vector<8x8xf32> to vector<8xf32>
    %230 = vector.shape_cast %229 : vector<8xf32> to vector<8x1xf32>
    %231 = vector.broadcast %230 : vector<8x1xf32> to vector<8x8xf32>
    %232 = arith.subf %228, %231 : vector<8x8xf32>
    %233 = math.exp %232 : vector<8x8xf32>
    %cst_78 = arith.constant dense<0.000000e+00> : vector<8xf32>
    %234 = vector.multi_reduction <add>, %233, %cst_78 [1] : vector<8x8xf32> to vector<8xf32>
    %235 = vector.shape_cast %234 : vector<8xf32> to vector<8x1xf32>
    %236 = tpu.reciprocal %235 {approx = true} : vector<8x1xf32> -> vector<8x1xf32>
    %237 = arith.truncf %233 : vector<8x8xf32> to vector<8x8xbf16>
    %238 = vector.extract_strided_slice %171 {offsets = [0, 96], sizes = [8, 32], strides = [1, 1]} : vector<8x256xbf16> to vector<8x32xbf16>
    %cst_79 = arith.constant dense<0.000000e+00> : vector<8x32xf32>
    %239 = tpu.matmul %237, %238, %cst_79 {dimension_numbers = #tpu.dot_dimension_numbers<[1], [0], [0], [1], [0, 0, 1, 1], [], []>} : vector<8x8xbf16>, vector<8x32xbf16>, vector<8x32xf32> -> vector<8x32xf32>
    %240 = vector.broadcast %236 : vector<8x1xf32> to vector<8x32xf32>
    %241 = arith.mulf %239, %240 : vector<8x32xf32>
    %242 = arith.truncf %241 : vector<8x32xf32> to vector<8x32xbf16>
    %c8_80 = arith.constant 8 : index
    %c96_81 = arith.constant 96 : index
    %243 = vector.load %arg14[%c8_80, %c96_81] : memref<16x256xbf16, #tpu.memory_space<vmem>>, vector<8x32xbf16>
    tpu.vector_store %arg14[%c8_80, %c96_81], %242 {strides = array<i32>} : memref<16x256xbf16, #tpu.memory_space<vmem>>, vector<8x32xbf16>,
    %244 = vector.extract_strided_slice %169 {offsets = [0, 128], sizes = [8, 32], strides = [1, 1]} : vector<8x256xbf16> to vector<8x32xbf16>
    %245 = vector.extract_strided_slice %170 {offsets = [0, 128], sizes = [8, 32], strides = [1, 1]} : vector<8x256xbf16> to vector<8x32xbf16>
    %cst_82 = arith.constant dense<0.000000e+00> : vector<8x8xf32>
    %246 = tpu.matmul %244, %245, %cst_82 {dimension_numbers = #tpu.dot_dimension_numbers<[1], [1], [0], [0], [0, 0, 1, 0], [], []>} : vector<8x32xbf16>, vector<8x32xbf16>, vector<8x8xf32> -> vector<8x8xf32>
    %cst_83 = arith.constant dense<0xFF800000> : vector<8xf32>
    %247 = vector.multi_reduction <maximumf>, %246, %cst_83 [1] : vector<8x8xf32> to vector<8xf32>
    %248 = vector.shape_cast %247 : vector<8xf32> to vector<8x1xf32>
    %249 = vector.broadcast %248 : vector<8x1xf32> to vector<8x8xf32>
    %250 = arith.subf %246, %249 : vector<8x8xf32>
    %251 = math.exp %250 : vector<8x8xf32>
    %cst_84 = arith.constant dense<0.000000e+00> : vector<8xf32>
    %252 = vector.multi_reduction <add>, %251, %cst_84 [1] : vector<8x8xf32> to vector<8xf32>
    %253 = vector.shape_cast %252 : vector<8xf32> to vector<8x1xf32>
    %254 = tpu.reciprocal %253 {approx = true} : vector<8x1xf32> -> vector<8x1xf32>
    %255 = arith.truncf %251 : vector<8x8xf32> to vector<8x8xbf16>
    %256 = vector.extract_strided_slice %171 {offsets = [0, 128], sizes = [8, 32], strides = [1, 1]} : vector<8x256xbf16> to vector<8x32xbf16>
    %cst_85 = arith.constant dense<0.000000e+00> : vector<8x32xf32>
    %257 = tpu.matmul %255, %256, %cst_85 {dimension_numbers = #tpu.dot_dimension_numbers<[1], [0], [0], [1], [0, 0, 1, 1], [], []>} : vector<8x8xbf16>, vector<8x32xbf16>, vector<8x32xf32> -> vector<8x32xf32>
    %258 = vector.broadcast %254 : vector<8x1xf32> to vector<8x32xf32>
    %259 = arith.mulf %257, %258 : vector<8x32xf32>
    %260 = arith.truncf %259 : vector<8x32xf32> to vector<8x32xbf16>
    %c8_86 = arith.constant 8 : index
    %c128_87 = arith.constant 128 : index
    %261 = vector.load %arg14[%c8_86, %c128_87] : memref<16x256xbf16, #tpu.memory_space<vmem>>, vector<8x32xbf16>
    tpu.vector_store %arg14[%c8_86, %c128_87], %260 {strides = array<i32>} : memref<16x256xbf16, #tpu.memory_space<vmem>>, vector<8x32xbf16>,
    %262 = vector.extract_strided_slice %169 {offsets = [0, 160], sizes = [8, 32], strides = [1, 1]} : vector<8x256xbf16> to vector<8x32xbf16>
    %263 = vector.extract_strided_slice %170 {offsets = [0, 160], sizes = [8, 32], strides = [1, 1]} : vector<8x256xbf16> to vector<8x32xbf16>
    %cst_88 = arith.constant dense<0.000000e+00> : vector<8x8xf32>
    %264 = tpu.matmul %262, %263, %cst_88 {dimension_numbers = #tpu.dot_dimension_numbers<[1], [1], [0], [0], [0, 0, 1, 0], [], []>} : vector<8x32xbf16>, vector<8x32xbf16>, vector<8x8xf32> -> vector<8x8xf32>
    %cst_89 = arith.constant dense<0xFF800000> : vector<8xf32>
    %265 = vector.multi_reduction <maximumf>, %264, %cst_89 [1] : vector<8x8xf32> to vector<8xf32>
    %266 = vector.shape_cast %265 : vector<8xf32> to vector<8x1xf32>
    %267 = vector.broadcast %266 : vector<8x1xf32> to vector<8x8xf32>
    %268 = arith.subf %264, %267 : vector<8x8xf32>
    %269 = math.exp %268 : vector<8x8xf32>
    %cst_90 = arith.constant dense<0.000000e+00> : vector<8xf32>
    %270 = vector.multi_reduction <add>, %269, %cst_90 [1] : vector<8x8xf32> to vector<8xf32>
    %271 = vector.shape_cast %270 : vector<8xf32> to vector<8x1xf32>
    %272 = tpu.reciprocal %271 {approx = true} : vector<8x1xf32> -> vector<8x1xf32>
    %273 = arith.truncf %269 : vector<8x8xf32> to vector<8x8xbf16>
    %274 = vector.extract_strided_slice %171 {offsets = [0, 160], sizes = [8, 32], strides = [1, 1]} : vector<8x256xbf16> to vector<8x32xbf16>
    %cst_91 = arith.constant dense<0.000000e+00> : vector<8x32xf32>
    %275 = tpu.matmul %273, %274, %cst_91 {dimension_numbers = #tpu.dot_dimension_numbers<[1], [0], [0], [1], [0, 0, 1, 1], [], []>} : vector<8x8xbf16>, vector<8x32xbf16>, vector<8x32xf32> -> vector<8x32xf32>
    %276 = vector.broadcast %272 : vector<8x1xf32> to vector<8x32xf32>
    %277 = arith.mulf %275, %276 : vector<8x32xf32>
    %278 = arith.truncf %277 : vector<8x32xf32> to vector<8x32xbf16>
    %c8_92 = arith.constant 8 : index
    %c160_93 = arith.constant 160 : index
    %279 = vector.load %arg14[%c8_92, %c160_93] : memref<16x256xbf16, #tpu.memory_space<vmem>>, vector<8x32xbf16>
    tpu.vector_store %arg14[%c8_92, %c160_93], %278 {strides = array<i32>} : memref<16x256xbf16, #tpu.memory_space<vmem>>, vector<8x32xbf16>,
    %280 = vector.extract_strided_slice %169 {offsets = [0, 192], sizes = [8, 32], strides = [1, 1]} : vector<8x256xbf16> to vector<8x32xbf16>
    %281 = vector.extract_strided_slice %170 {offsets = [0, 192], sizes = [8, 32], strides = [1, 1]} : vector<8x256xbf16> to vector<8x32xbf16>
    %cst_94 = arith.constant dense<0.000000e+00> : vector<8x8xf32>
    %282 = tpu.matmul %280, %281, %cst_94 {dimension_numbers = #tpu.dot_dimension_numbers<[1], [1], [0], [0], [0, 0, 1, 0], [], []>} : vector<8x32xbf16>, vector<8x32xbf16>, vector<8x8xf32> -> vector<8x8xf32>
    %cst_95 = arith.constant dense<0xFF800000> : vector<8xf32>
    %283 = vector.multi_reduction <maximumf>, %282, %cst_95 [1] : vector<8x8xf32> to vector<8xf32>
    %284 = vector.shape_cast %283 : vector<8xf32> to vector<8x1xf32>
    %285 = vector.broadcast %284 : vector<8x1xf32> to vector<8x8xf32>
    %286 = arith.subf %282, %285 : vector<8x8xf32>
    %287 = math.exp %286 : vector<8x8xf32>
    %cst_96 = arith.constant dense<0.000000e+00> : vector<8xf32>
    %288 = vector.multi_reduction <add>, %287, %cst_96 [1] : vector<8x8xf32> to vector<8xf32>
    %289 = vector.shape_cast %288 : vector<8xf32> to vector<8x1xf32>
    %290 = tpu.reciprocal %289 {approx = true} : vector<8x1xf32> -> vector<8x1xf32>
    %291 = arith.truncf %287 : vector<8x8xf32> to vector<8x8xbf16>
    %292 = vector.extract_strided_slice %171 {offsets = [0, 192], sizes = [8, 32], strides = [1, 1]} : vector<8x256xbf16> to vector<8x32xbf16>
    %cst_97 = arith.constant dense<0.000000e+00> : vector<8x32xf32>
    %293 = tpu.matmul %291, %292, %cst_97 {dimension_numbers = #tpu.dot_dimension_numbers<[1], [0], [0], [1], [0, 0, 1, 1], [], []>} : vector<8x8xbf16>, vector<8x32xbf16>, vector<8x32xf32> -> vector<8x32xf32>
    %294 = vector.broadcast %290 : vector<8x1xf32> to vector<8x32xf32>
    %295 = arith.mulf %293, %294 : vector<8x32xf32>
    %296 = arith.truncf %295 : vector<8x32xf32> to vector<8x32xbf16>
    %c8_98 = arith.constant 8 : index
    %c192_99 = arith.constant 192 : index
    %297 = vector.load %arg14[%c8_98, %c192_99] : memref<16x256xbf16, #tpu.memory_space<vmem>>, vector<8x32xbf16>
    tpu.vector_store %arg14[%c8_98, %c192_99], %296 {strides = array<i32>} : memref<16x256xbf16, #tpu.memory_space<vmem>>, vector<8x32xbf16>,
    %298 = vector.extract_strided_slice %169 {offsets = [0, 224], sizes = [8, 32], strides = [1, 1]} : vector<8x256xbf16> to vector<8x32xbf16>
    %299 = vector.extract_strided_slice %170 {offsets = [0, 224], sizes = [8, 32], strides = [1, 1]} : vector<8x256xbf16> to vector<8x32xbf16>
    %cst_100 = arith.constant dense<0.000000e+00> : vector<8x8xf32>
    %300 = tpu.matmul %298, %299, %cst_100 {dimension_numbers = #tpu.dot_dimension_numbers<[1], [1], [0], [0], [0, 0, 1, 0], [], []>} : vector<8x32xbf16>, vector<8x32xbf16>, vector<8x8xf32> -> vector<8x8xf32>
    %cst_101 = arith.constant dense<0xFF800000> : vector<8xf32>
    %301 = vector.multi_reduction <maximumf>, %300, %cst_101 [1] : vector<8x8xf32> to vector<8xf32>
    %302 = vector.shape_cast %301 : vector<8xf32> to vector<8x1xf32>
    %303 = vector.broadcast %302 : vector<8x1xf32> to vector<8x8xf32>
    %304 = arith.subf %300, %303 : vector<8x8xf32>
    %305 = math.exp %304 : vector<8x8xf32>
    %cst_102 = arith.constant dense<0.000000e+00> : vector<8xf32>
    %306 = vector.multi_reduction <add>, %305, %cst_102 [1] : vector<8x8xf32> to vector<8xf32>
    %307 = vector.shape_cast %306 : vector<8xf32> to vector<8x1xf32>
    %308 = tpu.reciprocal %307 {approx = true} : vector<8x1xf32> -> vector<8x1xf32>
    %309 = arith.truncf %305 : vector<8x8xf32> to vector<8x8xbf16>
    %310 = vector.extract_strided_slice %171 {offsets = [0, 224], sizes = [8, 32], strides = [1, 1]} : vector<8x256xbf16> to vector<8x32xbf16>
    %cst_103 = arith.constant dense<0.000000e+00> : vector<8x32xf32>
    %311 = tpu.matmul %309, %310, %cst_103 {dimension_numbers = #tpu.dot_dimension_numbers<[1], [0], [0], [1], [0, 0, 1, 1], [], []>} : vector<8x8xbf16>, vector<8x32xbf16>, vector<8x32xf32> -> vector<8x32xf32>
    %312 = vector.broadcast %308 : vector<8x1xf32> to vector<8x32xf32>
    %313 = arith.mulf %311, %312 : vector<8x32xf32>
    %314 = arith.truncf %313 : vector<8x32xf32> to vector<8x32xbf16>
    %c8_104 = arith.constant 8 : index
    %c224_105 = arith.constant 224 : index
    %315 = vector.load %arg14[%c8_104, %c224_105] : memref<16x256xbf16, #tpu.memory_space<vmem>>, vector<8x32xbf16>
    tpu.vector_store %arg14[%c8_104, %c224_105], %314 {strides = array<i32>} : memref<16x256xbf16, #tpu.memory_space<vmem>>, vector<8x32xbf16>,
    %c0_106 = arith.constant 0 : index
    %c0_107 = arith.constant 0 : index
    %316 = vector.load %arg14[%c0_106, %c0_107] : memref<16x256xbf16, #tpu.memory_space<vmem>>, vector<16x256xbf16>
    %c0_108 = arith.constant 0 : index
    %c0_109 = arith.constant 0 : index
    %317 = vector.load %arg6[%c0_108, %c0_109] : memref<256x256xbf16, #tpu.memory_space<vmem>>, vector<256x256xbf16>
    %cst_110 = arith.constant dense<0.000000e+00> : vector<16x256xf32>
    %318 = tpu.matmul %316, %317, %cst_110 {dimension_numbers = #tpu.dot_dimension_numbers<[1], [0], [0], [1], [0, 0, 1, 1], [], []>} : vector<16x256xbf16>, vector<256x256xbf16>, vector<16x256xf32> -> vector<16x256xf32>
    %c0_111 = arith.constant 0 : index
    %c0_112 = arith.constant 0 : index
    %319 = vector.load %arg10[%c0_111, %c0_112] : memref<1x256xf32, #tpu.memory_space<vmem>>, vector<1x256xf32>
    %320 = vector.broadcast %319 : vector<1x256xf32> to vector<16x256xf32>
    %321 = arith.addf %318, %320 : vector<16x256xf32>
    %322 = arith.extf %0 : vector<16x256xbf16> to vector<16x256xf32>
    %323 = arith.addf %322, %321 : vector<16x256xf32>
    %cst_113 = arith.constant dense<0.000000e+00> : vector<16xf32>
    %324 = vector.multi_reduction <add>, %323, %cst_113 [1] : vector<16x256xf32> to vector<16xf32>
    %325 = vector.shape_cast %324 : vector<16xf32> to vector<16x1xf32>
    %cst_114 = arith.constant 2.560000e+02 : f32
    %326 = vector.broadcast %cst_114 : f32 to vector<16x1xf32>
    %327 = arith.divf %325, %326 : vector<16x1xf32>
    %328 = vector.broadcast %327 : vector<16x1xf32> to vector<16x256xf32>
    %329 = arith.subf %323, %328 : vector<16x256xf32>
    %330 = arith.mulf %329, %329 : vector<16x256xf32>
    %cst_115 = arith.constant dense<0.000000e+00> : vector<16xf32>
    %331 = vector.multi_reduction <add>, %330, %cst_115 [1] : vector<16x256xf32> to vector<16xf32>
    %332 = vector.shape_cast %331 : vector<16xf32> to vector<16x1xf32>
    %cst_116 = arith.constant 2.560000e+02 : f32
    %333 = vector.broadcast %cst_116 : f32 to vector<16x1xf32>
    %334 = arith.divf %332, %333 : vector<16x1xf32>
    %cst_117 = arith.constant 9.99999974E-6 : f32
    %335 = vector.broadcast %cst_117 : f32 to vector<16x1xf32>
    %336 = arith.addf %334, %335 : vector<16x1xf32>
    %337 = math.rsqrt %336 : vector<16x1xf32>
    %338 = vector.broadcast %337 : vector<16x1xf32> to vector<16x256xf32>
    %339 = arith.mulf %329, %338 : vector<16x256xf32>
    %c0_118 = arith.constant 0 : index
    %c0_119 = arith.constant 0 : index
    %340 = vector.load %arg11[%c0_118, %c0_119] : memref<1x256xf32, #tpu.memory_space<vmem>>, vector<1x256xf32>
    %341 = vector.broadcast %340 : vector<1x256xf32> to vector<16x256xf32>
    %342 = arith.mulf %339, %341 : vector<16x256xf32>
    %c0_120 = arith.constant 0 : index
    %c0_121 = arith.constant 0 : index
    %343 = vector.load %arg12[%c0_120, %c0_121] : memref<1x256xf32, #tpu.memory_space<vmem>>, vector<1x256xf32>
    %344 = vector.broadcast %343 : vector<1x256xf32> to vector<16x256xf32>
    %345 = arith.addf %342, %344 : vector<16x256xf32>
    %346 = arith.truncf %345 : vector<16x256xf32> to vector<16x256xbf16>
    %c0_122 = arith.constant 0 : index
    %c0_123 = arith.constant 0 : index
    %347 = vector.load %arg13[%c0_122, %c0_123] : memref<16x256xbf16, #tpu.memory_space<vmem>>, vector<16x256xbf16>
    tpu.vector_store %arg13[%c0_122, %c0_123], %346 {strides = array<i32>} : memref<16x256xbf16, #tpu.memory_space<vmem>>, vector<16x256xbf16>,
    return
  }
  func.func @transform_0(%arg0: i32) -> (i32, i32) {
    %c0_i32 = arith.constant 0 : i32
    %c0_i32_0 = arith.constant 0 : i32
    return %arg0, %c0_i32 : i32, i32
  }
  func.func @transform_1(%arg0: i32) -> (i32, i32) {
    %c0_i32 = arith.constant 0 : i32
    %c0_i32_0 = arith.constant 0 : i32
    return %arg0, %c0_i32 : i32, i32
  }
  func.func @transform_2(%arg0: i32) -> (i32, i32) {
    %c0_i32 = arith.constant 0 : i32
    %c0_i32_0 = arith.constant 0 : i32
    %c0_i32_1 = arith.constant 0 : i32
    return %c0_i32, %c0_i32_0 : i32, i32
  }
  func.func @transform_3(%arg0: i32) -> (i32, i32) {
    %c0_i32 = arith.constant 0 : i32
    %c0_i32_0 = arith.constant 0 : i32
    %c0_i32_1 = arith.constant 0 : i32
    return %c0_i32, %c0_i32_0 : i32, i32
  }
  func.func @transform_4(%arg0: i32) -> (i32, i32) {
    %c0_i32 = arith.constant 0 : i32
    %c0_i32_0 = arith.constant 0 : i32
    %c0_i32_1 = arith.constant 0 : i32
    return %c0_i32, %c0_i32_0 : i32, i32
  }
  func.func @transform_5(%arg0: i32) -> (i32, i32) {
    %c0_i32 = arith.constant 0 : i32
    %c0_i32_0 = arith.constant 0 : i32
    %c0_i32_1 = arith.constant 0 : i32
    return %c0_i32, %c0_i32_0 : i32, i32
  }
  func.func @transform_6(%arg0: i32) -> (i32, i32) {
    %c0_i32 = arith.constant 0 : i32
    %c0_i32_0 = arith.constant 0 : i32
    %c0_i32_1 = arith.constant 0 : i32
    return %c0_i32, %c0_i32_0 : i32, i32
  }
  func.func @transform_7(%arg0: i32) -> (i32, i32) {
    %c0_i32 = arith.constant 0 : i32
    %c0_i32_0 = arith.constant 0 : i32
    %c0_i32_1 = arith.constant 0 : i32
    return %c0_i32, %c0_i32_0 : i32, i32
  }
  func.func @transform_8(%arg0: i32) -> (i32, i32) {
    %c0_i32 = arith.constant 0 : i32
    %c0_i32_0 = arith.constant 0 : i32
    %c0_i32_1 = arith.constant 0 : i32
    return %c0_i32, %c0_i32_0 : i32, i32
  }
  func.func @transform_9(%arg0: i32) -> (i32, i32) {
    %c0_i32 = arith.constant 0 : i32
    %c0_i32_0 = arith.constant 0 : i32
    %c0_i32_1 = arith.constant 0 : i32
    return %c0_i32, %c0_i32_0 : i32, i32
  }
  func.func @transform_10(%arg0: i32) -> (i32, i32) {
    %c0_i32 = arith.constant 0 : i32
    %c0_i32_0 = arith.constant 0 : i32
    %c0_i32_1 = arith.constant 0 : i32
    return %c0_i32, %c0_i32_0 : i32, i32
  }
  func.func @transform_11(%arg0: i32) -> (i32, i32) {
    %c0_i32 = arith.constant 0 : i32
    %c0_i32_0 = arith.constant 0 : i32
    %c0_i32_1 = arith.constant 0 : i32
    return %c0_i32, %c0_i32_0 : i32, i32
  }
  func.func @transform_12(%arg0: i32) -> (i32, i32) {
    %c0_i32 = arith.constant 0 : i32
    %c0_i32_0 = arith.constant 0 : i32
    return %arg0, %c0_i32 : i32, i32
  }
}

</mosaic_0001>

<llo_original>
// kernel: tpu_custom_call.1
$region0: #{tpu_custom_call.1}
  #allocation0 [shape = 'u32[]', space=smem, size = 0x4, offset = 0x4, fixed_abs, tag = 'smem constant byte address 0x4 - core index']
  #allocation1 [shape = 'u32[72,128]{1,0:T(1,128)}', space=vmem, size = 0x9000, scoped, tag = 'internal scratch']
  #allocation2 [shape = 'bf16[16,256]{1,0:T(8,128)(2,1)}', space=vmem, size = 0x2000, scoped, tag = 'scratch operand']
  %s0 = inlined_call_operand.hbm [shape: bf16[16,256], index: 0, kind: input, shape index: {}]
  %s1 = inlined_call_operand.hbm [shape: bf16[16,256], index: 1, kind: input, shape index: {}]
  %s2 = inlined_call_operand.hbm [shape: bf16[256,256], index: 2, kind: input, shape index: {}]
  %s3 = inlined_call_operand.hbm [shape: bf16[256,256], index: 3, kind: input, shape index: {}]
  %s4 = inlined_call_operand.hbm [shape: bf16[256,256], index: 4, kind: input, shape index: {}]
  %s5 = inlined_call_operand.hbm [shape: bf16[256,256], index: 5, kind: input, shape index: {}]
  %s6 = inlined_call_operand.vmem [shape: f32[1,256], index: 6, kind: input, shape index: {}]
  %s7 = inlined_call_operand.vmem [shape: f32[1,256], index: 7, kind: input, shape index: {}]
  %s8 = inlined_call_operand.vmem [shape: f32[1,256], index: 8, kind: input, shape index: {}]
  %s9 = inlined_call_operand.vmem [shape: f32[1,256], index: 9, kind: input, shape index: {}]
  %s10 = inlined_call_operand.hbm [shape: f32[1,256], index: 10, kind: input, shape index: {}]
  %s11 = inlined_call_operand.vmem [shape: f32[1,256], index: 11, kind: input, shape index: {}]
  %s12 = inlined_call_operand.hbm [shape: bf16[16,256], index: 12, kind: output, shape index: {}]
  %s13 = sld [smem:[#allocation0]]
  $region86: #{tpu_custom_call.1} parent=0
    _
  %s15 = ssub.s32 1, %s13
  %s16 = scalar_select 0, %s15, %s13
  $region1: #{tpu_custom_call.1} parent=0
    #allocation3 [shape = 'u8[8192]{0}', space=vmem, size = 0x2000, scoped, tag = 'input window, operand 0, single buffered']
    #allocation4 [shape = 's32[1]{0}', space=sflag, size = 0x4, scoped, tag = 'scoped memory for tpu_custom_call.1']
    #allocation5 [shape = 's32[1]{0}', space=sflag, size = 0x4, scoped, tag = 'scoped memory for tpu_custom_call.1']
    #allocation6 [shape = 'u8[8192]{0}', space=vmem, size = 0x2000, scoped, tag = 'input window, operand 1, single buffered']
    #allocation7 [shape = 's32[1]{0}', space=sflag, size = 0x4, scoped, tag = 'scoped memory for tpu_custom_call.1']
    #allocation8 [shape = 'u8[131072]{0}', space=vmem, size = 0x20000, scoped, tag = 'input window, operand 2, single buffered']
    #allocation9 [shape = 'u8[131072]{0}', space=vmem, size = 0x20000, scoped, tag = 'input window, operand 3, single buffered']
    #allocation10 [shape = 's32[1]{0}', space=sflag, size = 0x4, scoped, tag = 'scoped memory for tpu_custom_call.1']
    #allocation11 [shape = 'u8[131072]{0}', space=vmem, size = 0x20000, scoped, tag = 'input window, operand 4, single buffered']
    #allocation12 [shape = 'u8[131072]{0}', space=vmem, size = 0x20000, scoped, tag = 'input window, operand 5, single buffered']
    #allocation13 [shape = 's32[1]{0}', space=sflag, size = 0x4, scoped, tag = 'scoped memory for tpu_custom_call.1']
    #allocation14 [shape = 'u8[1024]{0}', space=vmem, size = 0x400, scoped, tag = 'input window, operand 10, single buffered']
    #allocation15 [shape = 'u8[8192]{0}', space=vmem, size = 0x2000, scoped, tag = 'output window, operand 0, single buffered']
    %17 = vsyncpa [#allocation4], 0
    %18 = vsyncpa [#allocation7], 0
    %19 = vsyncpa [#allocation10], 0
    %20 = vsyncpa [#allocation13], 0
    %21 = vsyncpa [#allocation5], 0
    // Predicated region
    $region2: #{tpu_custom_call.1} parent=1 // pred_check
      _
    $region3: #{tpu_custom_call.1} parent=1 // pred_check_branch
      %23 = sbr.rel (0) target = $region5
    $region4: #{tpu_custom_call.1} parent=1 // pred_region
      %25 = vsyncadd [#allocation4], 0
      %s26 = sshll.u32 %s0, 4
      %s27 = int_to_ptr.hbm [resolvable:$true] %s26
      %s28 = sshll.u32 [#allocation3], 4
      %s29 = int_to_ptr.vmem [resolvable:$true] %s28
      %34 = dma.hbm_to_vmem [thread:$0]  %s27, 256, %s29, [#allocation4], 128, 128, 8
    $region5: #{tpu_custom_call.1} parent=1 // pred_fallthru
      _
    // Predicated region
    $region6: #{tpu_custom_call.1} parent=1 // pred_check
      _
    $region7: #{tpu_custom_call.1} parent=1 // pred_check_branch
      %36 = sbr.rel (0) target = $region9
    $region8: #{tpu_custom_call.1} parent=1 // pred_region
      %38 = vsyncadd [#allocation7], 0
      %s39 = sshll.u32 %s1, 4
      %s40 = int_to_ptr.hbm [resolvable:$true] %s39
      %s41 = sshll.u32 [#allocation6], 4
      %s42 = int_to_ptr.vmem [resolvable:$true] %s41
      %47 = dma.hbm_to_vmem [thread:$0]  %s40, 256, %s42, [#allocation7], 128, 128, 8
    $region9: #{tpu_custom_call.1} parent=1 // pred_fallthru
      _
    // Predicated region
    $region10: #{tpu_custom_call.1} parent=1 // pred_check
      _
    $region11: #{tpu_custom_call.1} parent=1 // pred_check_branch
      %49 = sbr.rel (0) target = $region13
    $region12: #{tpu_custom_call.1} parent=1 // pred_region
      %51 = vsyncadd [#allocation7], 0
      %s52 = sshll.u32 %s2, 4
      %s53 = int_to_ptr.hbm [resolvable:$true] %s52
      %s54 = sshll.u32 [#allocation8], 4
      %s55 = int_to_ptr.vmem [resolvable:$true] %s54
      %60 = dma.hbm_to_vmem [thread:$0]  %s53, 4096, %s55, [#allocation7], 128, 128, 8
    $region13: #{tpu_custom_call.1} parent=1 // pred_fallthru
      _
    // Predicated region
    $region14: #{tpu_custom_call.1} parent=1 // pred_check
      _
    $region15: #{tpu_custom_call.1} parent=1 // pred_check_branch
      %62 = sbr.rel (0) target = $region17
    $region16: #{tpu_custom_call.1} parent=1 // pred_region
      %64 = vsyncadd [#allocation10], 0
      %s65 = sshll.u32 %s3, 4
      %s66 = int_to_ptr.hbm [resolvable:$true] %s65
      %s67 = sshll.u32 [#allocation9], 4
      %s68 = int_to_ptr.vmem [resolvable:$true] %s67
      %73 = dma.hbm_to_vmem [thread:$0]  %s66, 4096, %s68, [#allocation10], 128, 128, 8
    $region17: #{tpu_custom_call.1} parent=1 // pred_fallthru
      _
    // Predicated region
    $region18: #{tpu_custom_call.1} parent=1 // pred_check
      _
    $region19: #{tpu_custom_call.1} parent=1 // pred_check_branch
      %75 = sbr.rel (0) target = $region21
    $region20: #{tpu_custom_call.1} parent=1 // pred_region
      %77 = vsyncadd [#allocation10], 0
      %s78 = sshll.u32 %s4, 4
      %s79 = int_to_ptr.hbm [resolvable:$true] %s78
      %s80 = sshll.u32 [#allocation11], 4
      %s81 = int_to_ptr.vmem [resolvable:$true] %s80
      %86 = dma.hbm_to_vmem [thread:$0]  %s79, 4096, %s81, [#allocation10], 128, 128, 8
    $region21: #{tpu_custom_call.1} parent=1 // pred_fallthru
      _
    // Predicated region
    $region22: #{tpu_custom_call.1} parent=1 // pred_check
      _
    $region23: #{tpu_custom_call.1} parent=1 // pred_check_branch
      %88 = sbr.rel (0) target = $region25
    $region24: #{tpu_custom_call.1} parent=1 // pred_region
      %90 = vsyncadd [#allocation13], 0
      %s91 = sshll.u32 %s5, 4
      %s92 = int_to_ptr.hbm [resolvable:$true] %s91
      %s93 = sshll.u32 [#allocation12], 4
      %s94 = int_to_ptr.vmem [resolvable:$true] %s93
      %99 = dma.hbm_to_vmem [thread:$0]  %s92, 4096, %s94, [#allocation13], 128, 128, 8
    $region25: #{tpu_custom_call.1} parent=1 // pred_fallthru
      _
    // Predicated region
    $region26: #{tpu_custom_call.1} parent=1 // pred_check
      _
    $region27: #{tpu_custom_call.1} parent=1 // pred_check_branch
      %101 = sbr.rel (0) target = $region29
    $region28: #{tpu_custom_call.1} parent=1 // pred_region
      _
    $region29: #{tpu_custom_call.1} parent=1 // pred_fallthru
      _
    // Predicated region
    $region30: #{tpu_custom_call.1} parent=1 // pred_check
      _
    $region31: #{tpu_custom_call.1} parent=1 // pred_check_branch
      %103 = sbr.rel (0) target = $region33
    $region32: #{tpu_custom_call.1} parent=1 // pred_region
      _
    $region33: #{tpu_custom_call.1} parent=1 // pred_fallthru
      _
    // Predicated region
    $region34: #{tpu_custom_call.1} parent=1 // pred_check
      _
    $region35: #{tpu_custom_call.1} parent=1 // pred_check_branch
      %105 = sbr.rel (0) target = $region37
    $region36: #{tpu_custom_call.1} parent=1 // pred_region
      _
    $region37: #{tpu_custom_call.1} parent=1 // pred_fallthru
      _
    // Predicated region
    $region38: #{tpu_custom_call.1} parent=1 // pred_check
      _
    $region39: #{tpu_custom_call.1} parent=1 // pred_check_branch
      %107 = sbr.rel (0) target = $region41
    $region40: #{tpu_custom_call.1} parent=1 // pred_region
      _
    $region41: #{tpu_custom_call.1} parent=1 // pred_fallthru
      _
    // Predicated region
    $region42: #{tpu_custom_call.1} parent=1 // pred_check
      _
    $region43: #{tpu_custom_call.1} parent=1 // pred_check_branch
      %109 = sbr.rel (0) target = $region45
    $region44: #{tpu_custom_call.1} parent=1 // pred_region
      %111 = vsyncadd [#allocation13], 0
      %s113 = sshll.u32 %s10, 4
      %s114 = int_to_ptr.hbm [resolvable:$true] %s113
      %s115 = sshll.u32 [#allocation14], 4
      %s116 = int_to_ptr.vmem [resolvable:$true] %s115
      %118 = dma.hbm_to_vmem [thread:$0]  %s114, 32, %s116, [#allocation13]
    $region45: #{tpu_custom_call.1} parent=1 // pred_fallthru
      _
    // Predicated region
    $region46: #{tpu_custom_call.1} parent=1 // pred_check
      _
    $region47: #{tpu_custom_call.1} parent=1 // pred_check_branch
      %120 = sbr.rel (0) target = $region49
    $region48: #{tpu_custom_call.1} parent=1 // pred_region
      _
    $region49: #{tpu_custom_call.1} parent=1 // pred_fallthru
      _
    // Predicated region
    $region50: #{tpu_custom_call.1} parent=1 // pred_check
      _
    $region51: #{tpu_custom_call.1} parent=1 // pred_check_branch
      %122 = sbr.rel (0) target = $region53
    $region52: #{tpu_custom_call.1} parent=1 // pred_region
      %124 = dma.done [#allocation4], 256
    $region53: #{tpu_custom_call.1} parent=1 // pred_fallthru
      _
    // Predicated region
    $region54: #{tpu_custom_call.1} parent=1 // pred_check
      _
    $region55: #{tpu_custom_call.1} parent=1 // pred_check_branch
      %126 = sbr.rel (0) target = $region57
    $region56: #{tpu_custom_call.1} parent=1 // pred_region
      %128 = dma.done [#allocation7], 256
    $region57: #{tpu_custom_call.1} parent=1 // pred_fallthru
      _
    // Predicated region
    $region58: #{tpu_custom_call.1} parent=1 // pred_check
      _
    $region59: #{tpu_custom_call.1} parent=1 // pred_check_branch
      %130 = sbr.rel (0) target = $region61
    $region60: #{tpu_custom_call.1} parent=1 // pred_region
      %132 = dma.done [#allocation7], 4096
    $region61: #{tpu_custom_call.1} parent=1 // pred_fallthru
      _
    // Predicated region
    $region62: #{tpu_custom_call.1} parent=1 // pred_check
      _
    $region63: #{tpu_custom_call.1} parent=1 // pred_check_branch
      %134 = sbr.rel (0) target = $region65
    $region64: #{tpu_custom_call.1} parent=1 // pred_region
      %136 = dma.done [#allocation10], 4096
    $region65: #{tpu_custom_call.1} parent=1 // pred_fallthru
      _
    // Predicated region
    $region66: #{tpu_custom_call.1} parent=1 // pred_check
      _
    $region67: #{tpu_custom_call.1} parent=1 // pred_check_branch
      %138 = sbr.rel (0) target = $region69
    $region68: #{tpu_custom_call.1} parent=1 // pred_region
      %140 = dma.done [#allocation10], 4096
    $region69: #{tpu_custom_call.1} parent=1 // pred_fallthru
      _
    // Predicated region
    $region70: #{tpu_custom_call.1} parent=1 // pred_check
      _
    $region71: #{tpu_custom_call.1} parent=1 // pred_check_branch
      %142 = sbr.rel (0) target = $region73
    $region72: #{tpu_custom_call.1} parent=1 // pred_region
      %144 = dma.done [#allocation13], 4096
    $region73: #{tpu_custom_call.1} parent=1 // pred_fallthru
      _
    // Predicated region
    $region74: #{tpu_custom_call.1} parent=1 // pred_check
      _
    $region75: #{tpu_custom_call.1} parent=1 // pred_check_branch
      %146 = sbr.rel (0) target = $region77
    $region76: #{tpu_custom_call.1} parent=1 // pred_region
      %148 = dma.done [#allocation13], 32
    $region77: #{tpu_custom_call.1} parent=1 // pred_fallthru
      _
    %v150 = vld [vmem:[#allocation3] sm:$0xff]
    %v151 = vld [vmem:[#allocation3 + $0x8] sm:$0xff]
    %v152 = vld [vmem:[#allocation6] sm:$0xff]
    %v153 = vld [vmem:[#allocation6 + $0x8] sm:$0xff]
    %v154 = vld [vmem:[#allocation8] sm:$0xff]
    %v155 = vld [vmem:[#allocation8 + $0x8] sm:$0xff]
    %v156 = vld [vmem:[#allocation8 + $0x10] sm:$0xff]
    %v157 = vld [vmem:[#allocation8 + $0x18] sm:$0xff]
    %v158 = vld [vmem:[#allocation8 + $0x20] sm:$0xff]
    %v159 = vld [vmem:[#allocation8 + $0x28] sm:$0xff]
    %v160 = vld [vmem:[#allocation8 + $0x30] sm:$0xff]
    %v161 = vld [vmem:[#allocation8 + $0x38] sm:$0xff]
    %v162 = vld [vmem:[#allocation8 + $0x40] sm:$0xff]
    %v163 = vld [vmem:[#allocation8 + $0x48] sm:$0xff]
    %v164 = vld [vmem:[#allocation8 + $0x50] sm:$0xff]
    %v165 = vld [vmem:[#allocation8 + $0x58] sm:$0xff]
    %v166 = vld [vmem:[#allocation8 + $0x60] sm:$0xff]
    %v167 = vld [vmem:[#allocation8 + $0x68] sm:$0xff]
    %v168 = vld [vmem:[#allocation8 + $0x70] sm:$0xff]
    %v169 = vld [vmem:[#allocation8 + $0x78] sm:$0xff]
    %v170 = vld [vmem:[#allocation8 + $0x80] sm:$0xff]
    %v171 = vld [vmem:[#allocation8 + $0x88] sm:$0xff]
    %v172 = vld [vmem:[#allocation8 + $0x90] sm:$0xff]
    %v173 = vld [vmem:[#allocation8 + $0x98] sm:$0xff]
    %v174 = vld [vmem:[#allocation8 + $0xa0] sm:$0xff]
    %v175 = vld [vmem:[#allocation8 + $0xa8] sm:$0xff]
    %v176 = vld [vmem:[#allocation8 + $0xb0] sm:$0xff]
    %v177 = vld [vmem:[#allocation8 + $0xb8] sm:$0xff]
    %v178 = vld [vmem:[#allocation8 + $0xc0] sm:$0xff]
    %v179 = vld [vmem:[#allocation8 + $0xc8] sm:$0xff]
    %v180 = vld [vmem:[#allocation8 + $0xd0] sm:$0xff]
    %v181 = vld [vmem:[#allocation8 + $0xd8] sm:$0xff]
    %v182 = vld [vmem:[#allocation8 + $0xe0] sm:$0xff]
    %v183 = vld [vmem:[#allocation8 + $0xe8] sm:$0xff]
    %v184 = vld [vmem:[#allocation8 + $0xf0] sm:$0xff]
    %v185 = vld [vmem:[#allocation8 + $0xf8] sm:$0xff]
    %v186 = vld [vmem:[%s6] sm:$0x3]
    %v188 = vperm.slane %v186, 0
    %v189 = vperm.slane %v186, 1
    %v194 = vunpack.c.l.b16 %v150
    %v195 = vunpack.c.h.b16 %v150
    %v196 = vunpack.c.l.b16 %v151
    %v197 = vunpack.c.h.b16 %v151
    %v198 = vpack.c.b16 %v196, %v194
    %v199 = vpack.c.b16 %v197, %v195
    %v234 = vunpack.c.l.b16 %v154
    %v235 = vunpack.c.h.b16 %v154
    %v236 = vunpack.c.l.b16 %v155
    %v237 = vunpack.c.h.b16 %v155
    %v238 = vunpack.c.l.b16 %v156
    %v239 = vunpack.c.h.b16 %v156
    %v240 = vunpack.c.l.b16 %v157
    %v241 = vunpack.c.h.b16 %v157
    %v242 = vunpack.c.l.b16 %v158
    %v243 = vunpack.c.h.b16 %v158
    %v244 = vunpack.c.l.b16 %v159
    %v245 = vunpack.c.h.b16 %v159
    %v246 = vunpack.c.l.b16 %v160
    %v247 = vunpack.c.h.b16 %v160
    %v248 = vunpack.c.l.b16 %v161
    %v249 = vunpack.c.h.b16 %v161
    %v250 = vunpack.c.l.b16 %v162
    %v251 = vunpack.c.h.b16 %v162
    %v252 = vunpack.c.l.b16 %v163
    %v253 = vunpack.c.h.b16 %v163
    %v254 = vunpack.c.l.b16 %v164
    %v255 = vunpack.c.h.b16 %v164
    %v256 = vunpack.c.l.b16 %v165
    %v257 = vunpack.c.h.b16 %v165
    %v258 = vunpack.c.l.b16 %v166
    %v259 = vunpack.c.h.b16 %v166
    %v260 = vunpack.c.l.b16 %v167
    %v261 = vunpack.c.h.b16 %v167
    %v262 = vunpack.c.l.b16 %v168
    %v263 = vunpack.c.h.b16 %v168
    %v264 = vunpack.c.l.b16 %v169
    %v265 = vunpack.c.h.b16 %v169
    %v266 = vunpack.c.l.b16 %v170
    %v267 = vunpack.c.h.b16 %v170
    %v268 = vunpack.c.l.b16 %v171
    %v269 = vunpack.c.h.b16 %v171
    %v270 = vunpack.c.l.b16 %v172
    %v271 = vunpack.c.h.b16 %v172
    %v272 = vunpack.c.l.b16 %v173
    %v273 = vunpack.c.h.b16 %v173
    %v274 = vunpack.c.l.b16 %v174
    %v275 = vunpack.c.h.b16 %v174
    %v276 = vunpack.c.l.b16 %v175
    %v277 = vunpack.c.h.b16 %v175
    %v278 = vunpack.c.l.b16 %v176
    %v279 = vunpack.c.h.b16 %v176
    %v280 = vunpack.c.l.b16 %v177
    %v281 = vunpack.c.h.b16 %v177
    %v282 = vunpack.c.l.b16 %v178
    %v283 = vunpack.c.h.b16 %v178
    %v284 = vunpack.c.l.b16 %v179
    %v285 = vunpack.c.h.b16 %v179
    %v286 = vunpack.c.l.b16 %v180
    %v287 = vunpack.c.h.b16 %v180
    %v288 = vunpack.c.l.b16 %v181
    %v289 = vunpack.c.h.b16 %v181
    %v290 = vunpack.c.l.b16 %v182
    %v291 = vunpack.c.h.b16 %v182
    %v292 = vunpack.c.l.b16 %v183
    %v293 = vunpack.c.h.b16 %v183
    %v294 = vunpack.c.l.b16 %v184
    %v295 = vunpack.c.h.b16 %v184
    %v296 = vunpack.c.l.b16 %v185
    %v297 = vunpack.c.h.b16 %v185
    %v298 = vpack.c.b16 %v236, %v234
    %v299 = vpack.c.b16 %v237, %v235
    %v300 = vpack.c.b16 %v240, %v238
    %v301 = vpack.c.b16 %v241, %v239
    %v302 = vpack.c.b16 %v244, %v242
    %v303 = vpack.c.b16 %v245, %v243
    %v304 = vpack.c.b16 %v248, %v246
    %v305 = vpack.c.b16 %v249, %v247
    %v306 = vpack.c.b16 %v252, %v250
    %v307 = vpack.c.b16 %v253, %v251
    %v308 = vpack.c.b16 %v256, %v254
    %v309 = vpack.c.b16 %v257, %v255
    %v310 = vpack.c.b16 %v260, %v258
    %v311 = vpack.c.b16 %v261, %v259
    %v312 = vpack.c.b16 %v264, %v262
    %v313 = vpack.c.b16 %v265, %v263
    %v314 = vpack.c.b16 %v268, %v266
    %v315 = vpack.c.b16 %v269, %v267
    %v316 = vpack.c.b16 %v272, %v270
    %v317 = vpack.c.b16 %v273, %v271
    %v318 = vpack.c.b16 %v276, %v274
    %v319 = vpack.c.b16 %v277, %v275
    %v320 = vpack.c.b16 %v280, %v278
    %v321 = vpack.c.b16 %v281, %v279
    %v322 = vpack.c.b16 %v284, %v282
    %v323 = vpack.c.b16 %v285, %v283
    %v324 = vpack.c.b16 %v288, %v286
    %v325 = vpack.c.b16 %v289, %v287
    %v326 = vpack.c.b16 %v292, %v290
    %v327 = vpack.c.b16 %v293, %v291
    %v328 = vpack.c.b16 %v296, %v294
    %v329 = vpack.c.b16 %v297, %v295
    %362 = vmatpush.bf16.msra.mxu0 %v312
    %363 = vmatpush.bf16.msra.mxu0 %v310
    %364 = vmatpush.bf16.msra.mxu0 %v308
    %365 = vmatpush.bf16.msra.mxu0 %v306
    %366 = vmatpush.bf16.msra.mxu0 %v304
    %367 = vmatpush.bf16.msra.mxu0 %v302
    %368 = vmatpush.bf16.msra.mxu0 %v300
    %369 = vmatpush.bf16.msra.mxu0 %v298
    %370 = vmatmul.bf16.gmra.mxu0 %v198
    %v371 = vpop.f32.mrf.mxu0
    %v372 = vadd.f32 %v188, %v371
    %v373 = vpop.f32.mrf.mxu0
    %v374 = vadd.f32 %v188, %v373
    %375 = vdwg.mxu0
    %376 = vmatpush.bf16.msra.mxu0 %v328
    %377 = vmatpush.bf16.msra.mxu0 %v326
    %378 = vmatpush.bf16.msra.mxu0 %v324
    %379 = vmatpush.bf16.msra.mxu0 %v322
    %380 = vmatpush.bf16.msra.mxu0 %v320
    %381 = vmatpush.bf16.msra.mxu0 %v318
    %382 = vmatpush.bf16.msra.mxu0 %v316
    %383 = vmatpush.bf16.msra.mxu0 %v314
    %384 = vmatmul.bf16.gmra.mxu0 %v199
    %v385 = vpop.f32.mrf.mxu0
    %v386 = vadd.f32 %v372, %v385
    %v387 = vpop.f32.mrf.mxu0
    %v388 = vadd.f32 %v374, %v387
    %389 = vdwg.mxu0
    %390 = vmatpush.bf16.msra.mxu0 %v313
    %391 = vmatpush.bf16.msra.mxu0 %v311
    %392 = vmatpush.bf16.msra.mxu0 %v309
    %393 = vmatpush.bf16.msra.mxu0 %v307
    %394 = vmatpush.bf16.msra.mxu0 %v305
    %395 = vmatpush.bf16.msra.mxu0 %v303
    %396 = vmatpush.bf16.msra.mxu0 %v301
    %397 = vmatpush.bf16.msra.mxu0 %v299
    %398 = vmatmul.bf16.gmra.mxu0 %v198
    %v399 = vpop.f32.mrf.mxu0
    %v400 = vadd.f32 %v189, %v399
    %v401 = vpop.f32.mrf.mxu0
    %v402 = vadd.f32 %v189, %v401
    %403 = vdwg.mxu0
    %404 = vmatpush.bf16.msra.mxu0 %v329
    %405 = vmatpush.bf16.msra.mxu0 %v327
    %406 = vmatpush.bf16.msra.mxu0 %v325
    %407 = vmatpush.bf16.msra.mxu0 %v323
    %408 = vmatpush.bf16.msra.mxu0 %v321
    %409 = vmatpush.bf16.msra.mxu0 %v319
    %410 = vmatpush.bf16.msra.mxu0 %v317
    %411 = vmatpush.bf16.msra.mxu0 %v315
    %412 = vmatmul.bf16.gmra.mxu0 %v199
    %v413 = vpop.f32.mrf.mxu0
    %v414 = vadd.f32 %v400, %v413
    %v415 = vpop.f32.mrf.mxu0
    %v416 = vadd.f32 %v402, %v415
    %417 = vdwg.mxu0
    %v418 = vmul.f32 %v386, 0.17677669
    %v419 = vmul.f32 %v414, 0.17677669
    %v420 = vmul.f32 %v388, 0.17677669
    %v421 = vmul.f32 %v416, 0.17677669
    %v422 = vld [vmem:[#allocation9] sm:$0xff]
    %v423 = vld [vmem:[#allocation9 + $0x8] sm:$0xff]
    %v424 = vld [vmem:[#allocation9 + $0x10] sm:$0xff]
    %v425 = vld [vmem:[#allocation9 + $0x18] sm:$0xff]
    %v426 = vld [vmem:[#allocation9 + $0x20] sm:$0xff]
    %v427 = vld [vmem:[#allocation9 + $0x28] sm:$0xff]
    %v428 = vld [vmem:[#allocation9 + $0x30] sm:$0xff]
    %v429 = vld [vmem:[#allocation9 + $0x38] sm:$0xff]
    %v430 = vld [vmem:[#allocation9 + $0x40] sm:$0xff]
    %v431 = vld [vmem:[#allocation9 + $0x48] sm:$0xff]
    %v432 = vld [vmem:[#allocation9 + $0x50] sm:$0xff]
    %v433 = vld [vmem:[#allocation9 + $0x58] sm:$0xff]
    %v434 = vld [vmem:[#allocation9 + $0x60] sm:$0xff]
    %v435 = vld [vmem:[#allocation9 + $0x68] sm:$0xff]
    %v436 = vld [vmem:[#allocation9 + $0x70] sm:$0xff]
    %v437 = vld [vmem:[#allocation9 + $0x78] sm:$0xff]
    %v438 = vld [vmem:[#allocation9 + $0x80] sm:$0xff]
    %v439 = vld [vmem:[#allocation9 + $0x88] sm:$0xff]
    %v440 = vld [vmem:[#allocation9 + $0x90] sm:$0xff]
    %v441 = vld [vmem:[#allocation9 + $0x98] sm:$0xff]
    %v442 = vld [vmem:[#allocation9 + $0xa0] sm:$0xff]
    %v443 = vld [vmem:[#allocation9 + $0xa8] sm:$0xff]
    %v444 = vld [vmem:[#allocation9 + $0xb0] sm:$0xff]
    %v445 = vld [vmem:[#allocation9 + $0xb8] sm:$0xff]
    %v446 = vld [vmem:[#allocation9 + $0xc0] sm:$0xff]
    %v447 = vld [vmem:[#allocation9 + $0xc8] sm:$0xff]
    %v448 = vld [vmem:[#allocation9 + $0xd0] sm:$0xff]
    %v449 = vld [vmem:[#allocation9 + $0xd8] sm:$0xff]
    %v450 = vld [vmem:[#allocation9 + $0xe0] sm:$0xff]
    %v451 = vld [vmem:[#allocation9 + $0xe8] sm:$0xff]
    %v452 = vld [vmem:[#allocation9 + $0xf0] sm:$0xff]
    %v453 = vld [vmem:[#allocation9 + $0xf8] sm:$0xff]
    %v454 = vld [vmem:[%s7] sm:$0x3]
    %v456 = vperm.slane %v454, 0
    %v457 = vperm.slane %v454, 1
    %v462 = vunpack.c.l.b16 %v152
    %v463 = vunpack.c.h.b16 %v152
    %v464 = vunpack.c.l.b16 %v153
    %v465 = vunpack.c.h.b16 %v153
    %v466 = vpack.c.b16 %v464, %v462
    %v467 = vpack.c.b16 %v465, %v463
    %v502 = vunpack.c.l.b16 %v422
    %v503 = vunpack.c.h.b16 %v422
    %v504 = vunpack.c.l.b16 %v423
    %v505 = vunpack.c.h.b16 %v423
    %v506 = vunpack.c.l.b16 %v424
    %v507 = vunpack.c.h.b16 %v424
    %v508 = vunpack.c.l.b16 %v425
    %v509 = vunpack.c.h.b16 %v425
    %v510 = vunpack.c.l.b16 %v426
    %v511 = vunpack.c.h.b16 %v426
    %v512 = vunpack.c.l.b16 %v427
    %v513 = vunpack.c.h.b16 %v427
    %v514 = vunpack.c.l.b16 %v428
    %v515 = vunpack.c.h.b16 %v428
    %v516 = vunpack.c.l.b16 %v429
    %v517 = vunpack.c.h.b16 %v429
    %v518 = vunpack.c.l.b16 %v430
    %v519 = vunpack.c.h.b16 %v430
    %v520 = vunpack.c.l.b16 %v431
    %v521 = vunpack.c.h.b16 %v431
    %v522 = vunpack.c.l.b16 %v432
    %v523 = vunpack.c.h.b16 %v432
    %v524 = vunpack.c.l.b16 %v433
    %v525 = vunpack.c.h.b16 %v433
    %v526 = vunpack.c.l.b16 %v434
    %v527 = vunpack.c.h.b16 %v434
    %v528 = vunpack.c.l.b16 %v435
    %v529 = vunpack.c.h.b16 %v435
    %v530 = vunpack.c.l.b16 %v436
    %v531 = vunpack.c.h.b16 %v436
    %v532 = vunpack.c.l.b16 %v437
    %v533 = vunpack.c.h.b16 %v437
    %v534 = vunpack.c.l.b16 %v438
    %v535 = vunpack.c.h.b16 %v438
    %v536 = vunpack.c.l.b16 %v439
    %v537 = vunpack.c.h.b16 %v439
    %v538 = vunpack.c.l.b16 %v440
    %v539 = vunpack.c.h.b16 %v440
    %v540 = vunpack.c.l.b16 %v441
    %v541 = vunpack.c.h.b16 %v441
    %v542 = vunpack.c.l.b16 %v442
    %v543 = vunpack.c.h.b16 %v442
    %v544 = vunpack.c.l.b16 %v443
    %v545 = vunpack.c.h.b16 %v443
    %v546 = vunpack.c.l.b16 %v444
    %v547 = vunpack.c.h.b16 %v444
    %v548 = vunpack.c.l.b16 %v445
    %v549 = vunpack.c.h.b16 %v445
    %v550 = vunpack.c.l.b16 %v446
    %v551 = vunpack.c.h.b16 %v446
    %v552 = vunpack.c.l.b16 %v447
    %v553 = vunpack.c.h.b16 %v447
    %v554 = vunpack.c.l.b16 %v448
    %v555 = vunpack.c.h.b16 %v448
    %v556 = vunpack.c.l.b16 %v449
    %v557 = vunpack.c.h.b16 %v449
    %v558 = vunpack.c.l.b16 %v450
    %v559 = vunpack.c.h.b16 %v450
    %v560 = vunpack.c.l.b16 %v451
    %v561 = vunpack.c.h.b16 %v451
    %v562 = vunpack.c.l.b16 %v452
    %v563 = vunpack.c.h.b16 %v452
    %v564 = vunpack.c.l.b16 %v453
    %v565 = vunpack.c.h.b16 %v453
    %v566 = vpack.c.b16 %v504, %v502
    %v567 = vpack.c.b16 %v505, %v503
    %v568 = vpack.c.b16 %v508, %v506
    %v569 = vpack.c.b16 %v509, %v507
    %v570 = vpack.c.b16 %v512, %v510
    %v571 = vpack.c.b16 %v513, %v511
    %v572 = vpack.c.b16 %v516, %v514
    %v573 = vpack.c.b16 %v517, %v515
    %v574 = vpack.c.b16 %v520, %v518
    %v575 = vpack.c.b16 %v521, %v519
    %v576 = vpack.c.b16 %v524, %v522
    %v577 = vpack.c.b16 %v525, %v523
    %v578 = vpack.c.b16 %v528, %v526
    %v579 = vpack.c.b16 %v529, %v527
    %v580 = vpack.c.b16 %v532, %v530
    %v581 = vpack.c.b16 %v533, %v531
    %v582 = vpack.c.b16 %v536, %v534
    %v583 = vpack.c.b16 %v537, %v535
    %v584 = vpack.c.b16 %v540, %v538
    %v585 = vpack.c.b16 %v541, %v539
    %v586 = vpack.c.b16 %v544, %v542
    %v587 = vpack.c.b16 %v545, %v543
    %v588 = vpack.c.b16 %v548, %v546
    %v589 = vpack.c.b16 %v549, %v547
    %v590 = vpack.c.b16 %v552, %v550
    %v591 = vpack.c.b16 %v553, %v551
    %v592 = vpack.c.b16 %v556, %v554
    %v593 = vpack.c.b16 %v557, %v555
    %v594 = vpack.c.b16 %v560, %v558
    %v595 = vpack.c.b16 %v561, %v559
    %v596 = vpack.c.b16 %v564, %v562
    %v597 = vpack.c.b16 %v565, %v563
    %630 = vmatpush.bf16.msra.mxu0 %v580
    %631 = vmatpush.bf16.msra.mxu0 %v578
    %632 = vmatpush.bf16.msra.mxu0 %v576
    %633 = vmatpush.bf16.msra.mxu0 %v574
    %634 = vmatpush.bf16.msra.mxu0 %v572
    %635 = vmatpush.bf16.msra.mxu0 %v570
    %636 = vmatpush.bf16.msra.mxu0 %v568
    %637 = vmatpush.bf16.msra.mxu0 %v566
    %638 = vmatmul.bf16.gmra.mxu0 %v466
    %v639 = vpop.f32.mrf.mxu0
    %v640 = vadd.f32 %v456, %v639
    %v641 = vpop.f32.mrf.mxu0
    %v642 = vadd.f32 %v456, %v641
    %643 = vdwg.mxu0
    %644 = vmatpush.bf16.msra.mxu0 %v596
    %645 = vmatpush.bf16.msra.mxu0 %v594
    %646 = vmatpush.bf16.msra.mxu0 %v592
    %647 = vmatpush.bf16.msra.mxu0 %v590
    %648 = vmatpush.bf16.msra.mxu0 %v588
    %649 = vmatpush.bf16.msra.mxu0 %v586
    %650 = vmatpush.bf16.msra.mxu0 %v584
    %651 = vmatpush.bf16.msra.mxu0 %v582
    %652 = vmatmul.bf16.gmra.mxu0 %v467
    %v653 = vpop.f32.mrf.mxu0
    %v654 = vadd.f32 %v640, %v653
    %v655 = vpop.f32.mrf.mxu0
    %v656 = vadd.f32 %v642, %v655
    %657 = vdwg.mxu0
    %658 = vmatpush.bf16.msra.mxu0 %v581
    %659 = vmatpush.bf16.msra.mxu0 %v579
    %660 = vmatpush.bf16.msra.mxu0 %v577
    %661 = vmatpush.bf16.msra.mxu0 %v575
    %662 = vmatpush.bf16.msra.mxu0 %v573
    %663 = vmatpush.bf16.msra.mxu0 %v571
    %664 = vmatpush.bf16.msra.mxu0 %v569
    %665 = vmatpush.bf16.msra.mxu0 %v567
    %666 = vmatmul.bf16.gmra.mxu0 %v466
    %v667 = vpop.f32.mrf.mxu0
    %v668 = vadd.f32 %v457, %v667
    %v669 = vpop.f32.mrf.mxu0
    %v670 = vadd.f32 %v457, %v669
    %671 = vdwg.mxu0
    %672 = vmatpush.bf16.msra.mxu0 %v597
    %673 = vmatpush.bf16.msra.mxu0 %v595
    %674 = vmatpush.bf16.msra.mxu0 %v593
    %675 = vmatpush.bf16.msra.mxu0 %v591
    %676 = vmatpush.bf16.msra.mxu0 %v589
    %677 = vmatpush.bf16.msra.mxu0 %v587
    %678 = vmatpush.bf16.msra.mxu0 %v585
    %679 = vmatpush.bf16.msra.mxu0 %v583
    %680 = vmatmul.bf16.gmra.mxu0 %v467
    %v681 = vpop.f32.mrf.mxu0
    %v682 = vadd.f32 %v668, %v681
    %v683 = vpop.f32.mrf.mxu0
    %v684 = vadd.f32 %v670, %v683
    %685 = vdwg.mxu0
    %v686 = vld [vmem:[#allocation11] sm:$0xff]
    %v687 = vld [vmem:[#allocation11 + $0x8] sm:$0xff]
    %v688 = vld [vmem:[#allocation11 + $0x10] sm:$0xff]
    %v689 = vld [vmem:[#allocation11 + $0x18] sm:$0xff]
    %v690 = vld [vmem:[#allocation11 + $0x20] sm:$0xff]
    %v691 = vld [vmem:[#allocation11 + $0x28] sm:$0xff]
    %v692 = vld [vmem:[#allocation11 + $0x30] sm:$0xff]
    %v693 = vld [vmem:[#allocation11 + $0x38] sm:$0xff]
    %v694 = vld [vmem:[#allocation11 + $0x40] sm:$0xff]
    %v695 = vld [vmem:[#allocation11 + $0x48] sm:$0xff]
    %v696 = vld [vmem:[#allocation11 + $0x50] sm:$0xff]
    %v697 = vld [vmem:[#allocation11 + $0x58] sm:$0xff]
    %v698 = vld [vmem:[#allocation11 + $0x60] sm:$0xff]
    %v699 = vld [vmem:[#allocation11 + $0x68] sm:$0xff]
    %v700 = vld [vmem:[#allocation11 + $0x70] sm:$0xff]
    %v701 = vld [vmem:[#allocation11 + $0x78] sm:$0xff]
    %v702 = vld [vmem:[#allocation11 + $0x80] sm:$0xff]
    %v703 = vld [vmem:[#allocation11 + $0x88] sm:$0xff]
    %v704 = vld [vmem:[#allocation11 + $0x90] sm:$0xff]
    %v705 = vld [vmem:[#allocation11 + $0x98] sm:$0xff]
    %v706 = vld [vmem:[#allocation11 + $0xa0] sm:$0xff]
    %v707 = vld [vmem:[#allocation11 + $0xa8] sm:$0xff]
    %v708 = vld [vmem:[#allocation11 + $0xb0] sm:$0xff]
    %v709 = vld [vmem:[#allocation11 + $0xb8] sm:$0xff]
    %v710 = vld [vmem:[#allocation11 + $0xc0] sm:$0xff]
    %v711 = vld [vmem:[#allocation11 + $0xc8] sm:$0xff]
    %v712 = vld [vmem:[#allocation11 + $0xd0] sm:$0xff]
    %v713 = vld [vmem:[#allocation11 + $0xd8] sm:$0xff]
    %v714 = vld [vmem:[#allocation11 + $0xe0] sm:$0xff]
    %v715 = vld [vmem:[#allocation11 + $0xe8] sm:$0xff]
    %v716 = vld [vmem:[#allocation11 + $0xf0] sm:$0xff]
    %v717 = vld [vmem:[#allocation11 + $0xf8] sm:$0xff]
    %v718 = vld [vmem:[%s8] sm:$0x3]
    %v720 = vperm.slane %v718, 0
    %v721 = vperm.slane %v718, 1
    %v756 = vunpack.c.l.b16 %v686
    %v757 = vunpack.c.h.b16 %v686
    %v758 = vunpack.c.l.b16 %v687
    %v759 = vunpack.c.h.b16 %v687
    %v760 = vunpack.c.l.b16 %v688
    %v761 = vunpack.c.h.b16 %v688
    %v762 = vunpack.c.l.b16 %v689
    %v763 = vunpack.c.h.b16 %v689
    %v764 = vunpack.c.l.b16 %v690
    %v765 = vunpack.c.h.b16 %v690
    %v766 = vunpack.c.l.b16 %v691
    %v767 = vunpack.c.h.b16 %v691
    %v768 = vunpack.c.l.b16 %v692
    %v769 = vunpack.c.h.b16 %v692
    %v770 = vunpack.c.l.b16 %v693
    %v771 = vunpack.c.h.b16 %v693
    %v772 = vunpack.c.l.b16 %v694
    %v773 = vunpack.c.h.b16 %v694
    %v774 = vunpack.c.l.b16 %v695
    %v775 = vunpack.c.h.b16 %v695
    %v776 = vunpack.c.l.b16 %v696
    %v777 = vunpack.c.h.b16 %v696
    %v778 = vunpack.c.l.b16 %v697
    %v779 = vunpack.c.h.b16 %v697
    %v780 = vunpack.c.l.b16 %v698
    %v781 = vunpack.c.h.b16 %v698
    %v782 = vunpack.c.l.b16 %v699
    %v783 = vunpack.c.h.b16 %v699
    %v784 = vunpack.c.l.b16 %v700
    %v785 = vunpack.c.h.b16 %v700
    %v786 = vunpack.c.l.b16 %v701
    %v787 = vunpack.c.h.b16 %v701
    %v788 = vunpack.c.l.b16 %v702
    %v789 = vunpack.c.h.b16 %v702
    %v790 = vunpack.c.l.b16 %v703
    %v791 = vunpack.c.h.b16 %v703
    %v792 = vunpack.c.l.b16 %v704
    %v793 = vunpack.c.h.b16 %v704
    %v794 = vunpack.c.l.b16 %v705
    %v795 = vunpack.c.h.b16 %v705
    %v796 = vunpack.c.l.b16 %v706
    %v797 = vunpack.c.h.b16 %v706
    %v798 = vunpack.c.l.b16 %v707
    %v799 = vunpack.c.h.b16 %v707
    %v800 = vunpack.c.l.b16 %v708
    %v801 = vunpack.c.h.b16 %v708
    %v802 = vunpack.c.l.b16 %v709
    %v803 = vunpack.c.h.b16 %v709
    %v804 = vunpack.c.l.b16 %v710
    %v805 = vunpack.c.h.b16 %v710
    %v806 = vunpack.c.l.b16 %v711
    %v807 = vunpack.c.h.b16 %v711
    %v808 = vunpack.c.l.b16 %v712
    %v809 = vunpack.c.h.b16 %v712
    %v810 = vunpack.c.l.b16 %v713
    %v811 = vunpack.c.h.b16 %v713
    %v812 = vunpack.c.l.b16 %v714
    %v813 = vunpack.c.h.b16 %v714
    %v814 = vunpack.c.l.b16 %v715
    %v815 = vunpack.c.h.b16 %v715
    %v816 = vunpack.c.l.b16 %v716
    %v817 = vunpack.c.h.b16 %v716
    %v818 = vunpack.c.l.b16 %v717
    %v819 = vunpack.c.h.b16 %v717
    %v820 = vpack.c.b16 %v758, %v756
    %v821 = vpack.c.b16 %v759, %v757
    %v822 = vpack.c.b16 %v762, %v760
    %v823 = vpack.c.b16 %v763, %v761
    %v824 = vpack.c.b16 %v766, %v764
    %v825 = vpack.c.b16 %v767, %v765
    %v826 = vpack.c.b16 %v770, %v768
    %v827 = vpack.c.b16 %v771, %v769
    %v828 = vpack.c.b16 %v774, %v772
    %v829 = vpack.c.b16 %v775, %v773
    %v830 = vpack.c.b16 %v778, %v776
    %v831 = vpack.c.b16 %v779, %v777
    %v832 = vpack.c.b16 %v782, %v780
    %v833 = vpack.c.b16 %v783, %v781
    %v834 = vpack.c.b16 %v786, %v784
    %v835 = vpack.c.b16 %v787, %v785
    %v836 = vpack.c.b16 %v790, %v788
    %v837 = vpack.c.b16 %v791, %v789
    %v838 = vpack.c.b16 %v794, %v792
    %v839 = vpack.c.b16 %v795, %v793
    %v840 = vpack.c.b16 %v798, %v796
    %v841 = vpack.c.b16 %v799, %v797
    %v842 = vpack.c.b16 %v802, %v800
    %v843 = vpack.c.b16 %v803, %v801
    %v844 = vpack.c.b16 %v806, %v804
    %v845 = vpack.c.b16 %v807, %v805
    %v846 = vpack.c.b16 %v810, %v808
    %v847 = vpack.c.b16 %v811, %v809
    %v848 = vpack.c.b16 %v814, %v812
    %v849 = vpack.c.b16 %v815, %v813
    %v850 = vpack.c.b16 %v818, %v816
    %v851 = vpack.c.b16 %v819, %v817
    %884 = vmatpush.bf16.msra.mxu0 %v834
    %885 = vmatpush.bf16.msra.mxu0 %v832
    %886 = vmatpush.bf16.msra.mxu0 %v830
    %887 = vmatpush.bf16.msra.mxu0 %v828
    %888 = vmatpush.bf16.msra.mxu0 %v826
    %889 = vmatpush.bf16.msra.mxu0 %v824
    %890 = vmatpush.bf16.msra.mxu0 %v822
    %891 = vmatpush.bf16.msra.mxu0 %v820
    %892 = vmatmul.bf16.gmra.mxu0 %v466
    %v893 = vpop.f32.mrf.mxu0
    %v894 = vadd.f32 %v720, %v893
    %v895 = vpop.f32.mrf.mxu0
    %v896 = vadd.f32 %v720, %v895
    %897 = vdwg.mxu0
    %898 = vmatpush.bf16.msra.mxu0 %v850
    %899 = vmatpush.bf16.msra.mxu0 %v848
    %900 = vmatpush.bf16.msra.mxu0 %v846
    %901 = vmatpush.bf16.msra.mxu0 %v844
    %902 = vmatpush.bf16.msra.mxu0 %v842
    %903 = vmatpush.bf16.msra.mxu0 %v840
    %904 = vmatpush.bf16.msra.mxu0 %v838
    %905 = vmatpush.bf16.msra.mxu0 %v836
    %906 = vmatmul.bf16.gmra.mxu0 %v467
    %v907 = vpop.f32.mrf.mxu0
    %v908 = vadd.f32 %v894, %v907
    %v909 = vpop.f32.mrf.mxu0
    %v910 = vadd.f32 %v896, %v909
    %911 = vdwg.mxu0
    %912 = vmatpush.bf16.msra.mxu0 %v835
    %913 = vmatpush.bf16.msra.mxu0 %v833
    %914 = vmatpush.bf16.msra.mxu0 %v831
    %915 = vmatpush.bf16.msra.mxu0 %v829
    %916 = vmatpush.bf16.msra.mxu0 %v827
    %917 = vmatpush.bf16.msra.mxu0 %v825
    %918 = vmatpush.bf16.msra.mxu0 %v823
    %919 = vmatpush.bf16.msra.mxu0 %v821
    %920 = vmatmul.bf16.gmra.mxu0 %v466
    %v921 = vpop.f32.mrf.mxu0
    %v922 = vadd.f32 %v721, %v921
    %v923 = vpop.f32.mrf.mxu0
    %v924 = vadd.f32 %v721, %v923
    %925 = vdwg.mxu0
    %926 = vmatpush.bf16.msra.mxu0 %v851
    %927 = vmatpush.bf16.msra.mxu0 %v849
    %928 = vmatpush.bf16.msra.mxu0 %v847
    %929 = vmatpush.bf16.msra.mxu0 %v845
    %930 = vmatpush.bf16.msra.mxu0 %v843
    %931 = vmatpush.bf16.msra.mxu0 %v841
    %932 = vmatpush.bf16.msra.mxu0 %v839
    %933 = vmatpush.bf16.msra.mxu0 %v837
    %934 = vmatmul.bf16.gmra.mxu0 %v467
    %v935 = vpop.f32.mrf.mxu0
    %v936 = vadd.f32 %v922, %v935
    %v937 = vpop.f32.mrf.mxu0
    %v938 = vadd.f32 %v924, %v937
    %939 = vdwg.mxu0
    %v940 = vpack.c.bf16 %v419, %v418
    %v941 = vpack.c.bf16 %v421, %v420
    %v942 = vpack.c.bf16 %v682, %v654
    %v943 = vpack.c.bf16 %v684, %v656
    %v944 = vpack.c.bf16 %v936, %v908
    %v945 = vpack.c.bf16 %v938, %v910
    %vm946 = vcmask 261120
    %v948 = vsel %vm946, %v940, 0
    %v951 = vsel %vm946, %v942, 0
    %953 = vmatpush.bf16.xpose.msra.mxu0 0
    %954 = vmatpush.bf16.xpose.msra.mxu0 0
    %955 = vmatpush.bf16.xpose.msra.mxu0 0
    %956 = vmatpush.bf16.xpose.msra.mxu0 0
    %957 = vmatpush.bf16.xpose.msra.mxu0 0
    %958 = vmatpush.bf16.xpose.msra.mxu0 0
    %959 = vmatpush.bf16.xpose.msra.mxu0 0
    %960 = vmatpush.bf16.xpose.msra.mxu0 %v951
    %961 = vmatmul.bf16.gmra.mxu0 %v948
    %v962 = vpop.f32.mrf.mxu0
    %v963 = vadd.f32 0.0, %v962
    %v964 = vpop.f32.mrf.mxu0
    %965 = vdwg.mxu0
    %vm966 = vcmask 64512
    %v967 = vsel %vm966, %v963, -inf
    %968 = vmax.xlane.f32.xlu0 %v967
    %v969 = vpop.xlane.xlu0 %968
    %v970 = vsub.f32 %v963, %v969
    %v971 = vmul.f32 %v970, 1.442695
    %v972 = vpow.pop %v971
    %v973 = vsel %vm966, %v972, 0.0
    %974 = vadd.xlane.f32.xlu0 %v973
    %v975 = vpop.xlane.xlu0 %974
    %v976 = vrcp.pop %v975
    %v977 = vpack.c.bf16 %v972, %v972
    %v979 = vsel %vm966, %v977, 0
    %vm981 = vcmask 1043456
    %v983 = vsel %vm981, %v944, 0
    %985 = vmatpush.bf16.msra.mxu0 0
    %986 = vmatpush.bf16.msra.mxu0 0
    %987 = vmatpush.bf16.msra.mxu0 0
    %988 = vmatpush.bf16.msra.mxu0 0
    %989 = vmatpush.bf16.msra.mxu0 0
    %990 = vmatpush.bf16.msra.mxu0 0
    %991 = vmatpush.bf16.msra.mxu0 0
    %992 = vmatpush.bf16.msra.mxu0 %v983
    %993 = vmatmul.bf16.gmra.mxu0 %v979
    %v994 = vpop.f32.mrf.mxu0
    %v995 = vadd.f32 0.0, %v994
    %v996 = vpop.f32.mrf.mxu0
    %997 = vdwg.mxu0
    %v998 = vmul.f32 %v995, %v976
    %v999 = vpack.c.bf16 %v998, %v998
    %vm1000 = vcmask 257024
    %1001 = vst.msk [vmem:[#allocation2] sm:$0xf] %vm1000, %v999
    %v1003 = vunpack.c.l.b16 %v940
    %v1004 = vpack.c.b16 %v1003, %v1003
    %1005 = vrot.lane.b32.xlu0 %v1004, 96
    %v1006 = vpop.permute.xlu0 %1005
    %v1008 = vunpack.c.l.b16 %v942
    %v1009 = vpack.c.b16 %v1008, %v1008
    %1010 = vrot.lane.b32.xlu0 %v1009, 96
    %v1011 = vpop.permute.xlu0 %1010
    %v1013 = vsel %vm946, %v1006, 0
    %v1016 = vsel %vm946, %v1011, 0
    %1018 = vmatpush.bf16.xpose.msra.mxu0 0
    %1019 = vmatpush.bf16.xpose.msra.mxu0 0
    %1020 = vmatpush.bf16.xpose.msra.mxu0 0
    %1021 = vmatpush.bf16.xpose.msra.mxu0 0
    %1022 = vmatpush.bf16.xpose.msra.mxu0 0
    %1023 = vmatpush.bf16.xpose.msra.mxu0 0
    %1024 = vmatpush.bf16.xpose.msra.mxu0 0
    %1025 = vmatpush.bf16.xpose.msra.mxu0 %v1016
    %1026 = vmatmul.bf16.gmra.mxu0 %v1013
    %v1027 = vpop.f32.mrf.mxu0
    %v1028 = vadd.f32 0.0, %v1027
    %v1029 = vpop.f32.mrf.mxu0
    %1030 = vdwg.mxu0
    %v1031 = vsel %vm966, %v1028, -inf
    %1032 = vmax.xlane.f32.xlu0 %v1031
    %v1033 = vpop.xlane.xlu0 %1032
    %v1034 = vsub.f32 %v1028, %v1033
    %v1035 = vmul.f32 %v1034, 1.442695
    %v1036 = vpow.pop %v1035
    %v1037 = vsel %vm966, %v1036, 0.0
    %1038 = vadd.xlane.f32.xlu0 %v1037
    %v1039 = vpop.xlane.xlu0 %1038
    %v1040 = vrcp.pop %v1039
    %v1041 = vpack.c.bf16 %v1036, %v1036
    %v1043 = vunpack.c.l.b16 %v944
    %v1044 = vpack.c.b16 %v1043, %v1043
    %1045 = vrot.lane.b32.xlu0 %v1044, 96
    %v1046 = vpop.permute.xlu0 %1045
    %v1048 = vsel %vm966, %v1041, 0
    %v1051 = vsel %vm981, %v1046, 0
    %1053 = vmatpush.bf16.msra.mxu0 0
    %1054 = vmatpush.bf16.msra.mxu0 0
    %1055 = vmatpush.bf16.msra.mxu0 0
    %1056 = vmatpush.bf16.msra.mxu0 0
    %1057 = vmatpush.bf16.msra.mxu0 0
    %1058 = vmatpush.bf16.msra.mxu0 0
    %1059 = vmatpush.bf16.msra.mxu0 0
    %1060 = vmatpush.bf16.msra.mxu0 %v1051
    %1061 = vmatmul.bf16.gmra.mxu0 %v1048
    %v1062 = vpop.f32.mrf.mxu0
    %v1063 = vadd.f32 0.0, %v1062
    %v1064 = vpop.f32.mrf.mxu0
    %1065 = vdwg.mxu0
    %v1066 = vmul.f32 %v1063, %v1040
    %v1067 = vpack.c.bf16 %v1066, %v1066
    %1069 = vrot.lane.b32.xlu0 %v1067, 32
    %v1070 = vpop.permute.xlu0 %1069
    %vm1072 = vcmask 519424
    %1073 = vst.msk [vmem:[#allocation2] sm:$0xf] %vm1072, %v1070
    %1074 = vrot.lane.b32.xlu0 %v1004, 64
    %v1075 = vpop.permute.xlu0 %1074
    %1076 = vrot.lane.b32.xlu0 %v1009, 64
    %v1077 = vpop.permute.xlu0 %1076
    %v1079 = vsel %vm946, %v1075, 0
    %v1082 = vsel %vm946, %v1077, 0
    %1084 = vmatpush.bf16.xpose.msra.mxu0 0
    %1085 = vmatpush.bf16.xpose.msra.mxu0 0
    %1086 = vmatpush.bf16.xpose.msra.mxu0 0
    %1087 = vmatpush.bf16.xpose.msra.mxu0 0
    %1088 = vmatpush.bf16.xpose.msra.mxu0 0
    %1089 = vmatpush.bf16.xpose.msra.mxu0 0
    %1090 = vmatpush.bf16.xpose.msra.mxu0 0
    %1091 = vmatpush.bf16.xpose.msra.mxu0 %v1082
    %1092 = vmatmul.bf16.gmra.mxu0 %v1079
    %v1093 = vpop.f32.mrf.mxu0
    %v1094 = vadd.f32 0.0, %v1093
    %v1095 = vpop.f32.mrf.mxu0
    %1096 = vdwg.mxu0
    %v1097 = vsel %vm966, %v1094, -inf
    %1098 = vmax.xlane.f32.xlu0 %v1097
    %v1099 = vpop.xlane.xlu0 %1098
    %v1100 = vsub.f32 %v1094, %v1099
    %v1101 = vmul.f32 %v1100, 1.442695
    %v1102 = vpow.pop %v1101
    %v1103 = vsel %vm966, %v1102, 0.0
    %1104 = vadd.xlane.f32.xlu0 %v1103
    %v1105 = vpop.xlane.xlu0 %1104
    %v1106 = vrcp.pop %v1105
    %v1107 = vpack.c.bf16 %v1102, %v1102
    %1108 = vrot.lane.b32.xlu0 %v1044, 64
    %v1109 = vpop.permute.xlu0 %1108
    %v1111 = vsel %vm966, %v1107, 0
    %v1114 = vsel %vm981, %v1109, 0
    %1116 = vmatpush.bf16.msra.mxu0 0
    %1117 = vmatpush.bf16.msra.mxu0 0
    %1118 = vmatpush.bf16.msra.mxu0 0
    %1119 = vmatpush.bf16.msra.mxu0 0
    %1120 = vmatpush.bf16.msra.mxu0 0
    %1121 = vmatpush.bf16.msra.mxu0 0
    %1122 = vmatpush.bf16.msra.mxu0 0
    %1123 = vmatpush.bf16.msra.mxu0 %v1114
    %1124 = vmatmul.bf16.gmra.mxu0 %v1111
    %v1125 = vpop.f32.mrf.mxu0
    %v1126 = vadd.f32 0.0, %v1125
    %v1127 = vpop.f32.mrf.mxu0
    %1128 = vdwg.mxu0
    %v1129 = vmul.f32 %v1126, %v1106
    %v1130 = vpack.c.bf16 %v1129, %v1129
    %1132 = vrot.lane.b32.xlu0 %v1130, 64
    %v1133 = vpop.permute.xlu0 %1132
    %vm1135 = vcmask 781824
    %1136 = vst.msk [vmem:[#allocation2] sm:$0xf] %vm1135, %v1133
    %1137 = vrot.lane.b32.xlu0 %v1004, 32
    %v1138 = vpop.permute.xlu0 %1137
    %1139 = vrot.lane.b32.xlu0 %v1009, 32
    %v1140 = vpop.permute.xlu0 %1139
    %v1142 = vsel %vm946, %v1138, 0
    %v1145 = vsel %vm946, %v1140, 0
    %1147 = vmatpush.bf16.xpose.msra.mxu0 0
    %1148 = vmatpush.bf16.xpose.msra.mxu0 0
    %1149 = vmatpush.bf16.xpose.msra.mxu0 0
    %1150 = vmatpush.bf16.xpose.msra.mxu0 0
    %1151 = vmatpush.bf16.xpose.msra.mxu0 0
    %1152 = vmatpush.bf16.xpose.msra.mxu0 0
    %1153 = vmatpush.bf16.xpose.msra.mxu0 0
    %1154 = vmatpush.bf16.xpose.msra.mxu0 %v1145
    %1155 = vmatmul.bf16.gmra.mxu0 %v1142
    %v1156 = vpop.f32.mrf.mxu0
    %v1157 = vadd.f32 0.0, %v1156
    %v1158 = vpop.f32.mrf.mxu0
    %1159 = vdwg.mxu0
    %v1160 = vsel %vm966, %v1157, -inf
    %1161 = vmax.xlane.f32.xlu0 %v1160
    %v1162 = vpop.xlane.xlu0 %1161
    %v1163 = vsub.f32 %v1157, %v1162
    %v1164 = vmul.f32 %v1163, 1.442695
    %v1165 = vpow.pop %v1164
    %v1166 = vsel %vm966, %v1165, 0.0
    %1167 = vadd.xlane.f32.xlu0 %v1166
    %v1168 = vpop.xlane.xlu0 %1167
    %v1169 = vrcp.pop %v1168
    %v1170 = vpack.c.bf16 %v1165, %v1165
    %1171 = vrot.lane.b32.xlu0 %v1044, 32
    %v1172 = vpop.permute.xlu0 %1171
    %v1174 = vsel %vm966, %v1170, 0
    %v1177 = vsel %vm981, %v1172, 0
    %1179 = vmatpush.bf16.msra.mxu0 0
    %1180 = vmatpush.bf16.msra.mxu0 0
    %1181 = vmatpush.bf16.msra.mxu0 0
    %1182 = vmatpush.bf16.msra.mxu0 0
    %1183 = vmatpush.bf16.msra.mxu0 0
    %1184 = vmatpush.bf16.msra.mxu0 0
    %1185 = vmatpush.bf16.msra.mxu0 0
    %1186 = vmatpush.bf16.msra.mxu0 %v1177
    %1187 = vmatmul.bf16.gmra.mxu0 %v1174
    %v1188 = vpop.f32.mrf.mxu0
    %v1189 = vadd.f32 0.0, %v1188
    %v1190 = vpop.f32.mrf.mxu0
    %1191 = vdwg.mxu0
    %v1192 = vmul.f32 %v1189, %v1169
    %v1193 = vpack.c.bf16 %v1192, %v1192
    %1195 = vrot.lane.b32.xlu0 %v1193, 96
    %v1196 = vpop.permute.xlu0 %1195
    %vm1198 = vcmask 1044224
    %1199 = vst.msk [vmem:[#allocation2] sm:$0xf] %vm1198, %v1196
    %v1200 = vunpack.c.h.b16 %v940
    %v1201 = vpack.c.b16 %v1200, %v1200
    %v1202 = vunpack.c.h.b16 %v942
    %v1203 = vpack.c.b16 %v1202, %v1202
    %v1205 = vsel %vm946, %v1201, 0
    %v1208 = vsel %vm946, %v1203, 0
    %1210 = vmatpush.bf16.xpose.msra.mxu0 0
    %1211 = vmatpush.bf16.xpose.msra.mxu0 0
    %1212 = vmatpush.bf16.xpose.msra.mxu0 0
    %1213 = vmatpush.bf16.xpose.msra.mxu0 0
    %1214 = vmatpush.bf16.xpose.msra.mxu0 0
    %1215 = vmatpush.bf16.xpose.msra.mxu0 0
    %1216 = vmatpush.bf16.xpose.msra.mxu0 0
    %1217 = vmatpush.bf16.xpose.msra.mxu0 %v1208
    %1218 = vmatmul.bf16.gmra.mxu0 %v1205
    %v1219 = vpop.f32.mrf.mxu0
    %v1220 = vadd.f32 0.0, %v1219
    %v1221 = vpop.f32.mrf.mxu0
    %1222 = vdwg.mxu0
    %v1223 = vsel %vm966, %v1220, -inf
    %1224 = vmax.xlane.f32.xlu0 %v1223
    %v1225 = vpop.xlane.xlu0 %1224
    %v1226 = vsub.f32 %v1220, %v1225
    %v1227 = vmul.f32 %v1226, 1.442695
    %v1228 = vpow.pop %v1227
    %v1229 = vsel %vm966, %v1228, 0.0
    %1230 = vadd.xlane.f32.xlu0 %v1229
    %v1231 = vpop.xlane.xlu0 %1230
    %v1232 = vrcp.pop %v1231
    %v1233 = vpack.c.bf16 %v1228, %v1228
    %v1234 = vunpack.c.h.b16 %v944
    %v1235 = vpack.c.b16 %v1234, %v1234
    %v1237 = vsel %vm966, %v1233, 0
    %v1240 = vsel %vm981, %v1235, 0
    %1242 = vmatpush.bf16.msra.mxu0 0
    %1243 = vmatpush.bf16.msra.mxu0 0
    %1244 = vmatpush.bf16.msra.mxu0 0
    %1245 = vmatpush.bf16.msra.mxu0 0
    %1246 = vmatpush.bf16.msra.mxu0 0
    %1247 = vmatpush.bf16.msra.mxu0 0
    %1248 = vmatpush.bf16.msra.mxu0 0
    %1249 = vmatpush.bf16.msra.mxu0 %v1240
    %1250 = vmatmul.bf16.gmra.mxu0 %v1237
    %v1251 = vpop.f32.mrf.mxu0
    %v1252 = vadd.f32 0.0, %v1251
    %v1253 = vpop.f32.mrf.mxu0
    %1254 = vdwg.mxu0
    %v1255 = vmul.f32 %v1252, %v1232
    %v1256 = vpack.c.bf16 %v1255, %v1255
    %1257 = vst.msk [vmem:[#allocation2 + $0x4] sm:$0xf] %vm1000, %v1256
    %1258 = vrot.lane.b32.xlu0 %v1201, 96
    %v1259 = vpop.permute.xlu0 %1258
    %1260 = vrot.lane.b32.xlu0 %v1203, 96
    %v1261 = vpop.permute.xlu0 %1260
    %v1263 = vsel %vm946, %v1259, 0
    %v1266 = vsel %vm946, %v1261, 0
    %1268 = vmatpush.bf16.xpose.msra.mxu0 0
    %1269 = vmatpush.bf16.xpose.msra.mxu0 0
    %1270 = vmatpush.bf16.xpose.msra.mxu0 0
    %1271 = vmatpush.bf16.xpose.msra.mxu0 0
    %1272 = vmatpush.bf16.xpose.msra.mxu0 0
    %1273 = vmatpush.bf16.xpose.msra.mxu0 0
    %1274 = vmatpush.bf16.xpose.msra.mxu0 0
    %1275 = vmatpush.bf16.xpose.msra.mxu0 %v1266
    %1276 = vmatmul.bf16.gmra.mxu0 %v1263
    %v1277 = vpop.f32.mrf.mxu0
    %v1278 = vadd.f32 0.0, %v1277
    %v1279 = vpop.f32.mrf.mxu0
    %1280 = vdwg.mxu0
    %v1281 = vsel %vm966, %v1278, -inf
    %1282 = vmax.xlane.f32.xlu0 %v1281
    %v1283 = vpop.xlane.xlu0 %1282
    %v1284 = vsub.f32 %v1278, %v1283
    %v1285 = vmul.f32 %v1284, 1.442695
    %v1286 = vpow.pop %v1285
    %v1287 = vsel %vm966, %v1286, 0.0
    %1288 = vadd.xlane.f32.xlu0 %v1287
    %v1289 = vpop.xlane.xlu0 %1288
    %v1290 = vrcp.pop %v1289
    %v1291 = vpack.c.bf16 %v1286, %v1286
    %1292 = vrot.lane.b32.xlu0 %v1235, 96
    %v1293 = vpop.permute.xlu0 %1292
    %v1295 = vsel %vm966, %v1291, 0
    %v1298 = vsel %vm981, %v1293, 0
    %1300 = vmatpush.bf16.msra.mxu0 0
    %1301 = vmatpush.bf16.msra.mxu0 0
    %1302 = vmatpush.bf16.msra.mxu0 0
    %1303 = vmatpush.bf16.msra.mxu0 0
    %1304 = vmatpush.bf16.msra.mxu0 0
    %1305 = vmatpush.bf16.msra.mxu0 0
    %1306 = vmatpush.bf16.msra.mxu0 0
    %1307 = vmatpush.bf16.msra.mxu0 %v1298
    %1308 = vmatmul.bf16.gmra.mxu0 %v1295
    %v1309 = vpop.f32.mrf.mxu0
    %v1310 = vadd.f32 0.0, %v1309
    %v1311 = vpop.f32.mrf.mxu0
    %1312 = vdwg.mxu0
    %v1313 = vmul.f32 %v1310, %v1290
    %v1314 = vpack.c.bf16 %v1313, %v1313
    %1316 = vrot.lane.b32.xlu0 %v1314, 32
    %v1317 = vpop.permute.xlu0 %1316
    %1319 = vst.msk [vmem:[#allocation2 + $0x4] sm:$0xf] %vm1072, %v1317
    %1320 = vrot.lane.b32.xlu0 %v1201, 64
    %v1321 = vpop.permute.xlu0 %1320
    %1322 = vrot.lane.b32.xlu0 %v1203, 64
    %v1323 = vpop.permute.xlu0 %1322
    %v1325 = vsel %vm946, %v1321, 0
    %v1328 = vsel %vm946, %v1323, 0
    %1330 = vmatpush.bf16.xpose.msra.mxu0 0
    %1331 = vmatpush.bf16.xpose.msra.mxu0 0
    %1332 = vmatpush.bf16.xpose.msra.mxu0 0
    %1333 = vmatpush.bf16.xpose.msra.mxu0 0
    %1334 = vmatpush.bf16.xpose.msra.mxu0 0
    %1335 = vmatpush.bf16.xpose.msra.mxu0 0
    %1336 = vmatpush.bf16.xpose.msra.mxu0 0
    %1337 = vmatpush.bf16.xpose.msra.mxu0 %v1328
    %1338 = vmatmul.bf16.gmra.mxu0 %v1325
    %v1339 = vpop.f32.mrf.mxu0
    %v1340 = vadd.f32 0.0, %v1339
    %v1341 = vpop.f32.mrf.mxu0
    %1342 = vdwg.mxu0
    %v1343 = vsel %vm966, %v1340, -inf
    %1344 = vmax.xlane.f32.xlu0 %v1343
    %v1345 = vpop.xlane.xlu0 %1344
    %v1346 = vsub.f32 %v1340, %v1345
    %v1347 = vmul.f32 %v1346, 1.442695
    %v1348 = vpow.pop %v1347
    %v1349 = vsel %vm966, %v1348, 0.0
    %1350 = vadd.xlane.f32.xlu0 %v1349
    %v1351 = vpop.xlane.xlu0 %1350
    %v1352 = vrcp.pop %v1351
    %v1353 = vpack.c.bf16 %v1348, %v1348
    %1354 = vrot.lane.b32.xlu0 %v1235, 64
    %v1355 = vpop.permute.xlu0 %1354
    %v1357 = vsel %vm966, %v1353, 0
    %v1360 = vsel %vm981, %v1355, 0
    %1362 = vmatpush.bf16.msra.mxu0 0
    %1363 = vmatpush.bf16.msra.mxu0 0
    %1364 = vmatpush.bf16.msra.mxu0 0
    %1365 = vmatpush.bf16.msra.mxu0 0
    %1366 = vmatpush.bf16.msra.mxu0 0
    %1367 = vmatpush.bf16.msra.mxu0 0
    %1368 = vmatpush.bf16.msra.mxu0 0
    %1369 = vmatpush.bf16.msra.mxu0 %v1360
    %1370 = vmatmul.bf16.gmra.mxu0 %v1357
    %v1371 = vpop.f32.mrf.mxu0
    %v1372 = vadd.f32 0.0, %v1371
    %v1373 = vpop.f32.mrf.mxu0
    %1374 = vdwg.mxu0
    %v1375 = vmul.f32 %v1372, %v1352
    %v1376 = vpack.c.bf16 %v1375, %v1375
    %1378 = vrot.lane.b32.xlu0 %v1376, 64
    %v1379 = vpop.permute.xlu0 %1378
    %1381 = vst.msk [vmem:[#allocation2 + $0x4] sm:$0xf] %vm1135, %v1379
    %1382 = vrot.lane.b32.xlu0 %v1201, 32
    %v1383 = vpop.permute.xlu0 %1382
    %1384 = vrot.lane.b32.xlu0 %v1203, 32
    %v1385 = vpop.permute.xlu0 %1384
    %v1387 = vsel %vm946, %v1383, 0
    %v1390 = vsel %vm946, %v1385, 0
    %1392 = vmatpush.bf16.xpose.msra.mxu0 0
    %1393 = vmatpush.bf16.xpose.msra.mxu0 0
    %1394 = vmatpush.bf16.xpose.msra.mxu0 0
    %1395 = vmatpush.bf16.xpose.msra.mxu0 0
    %1396 = vmatpush.bf16.xpose.msra.mxu0 0
    %1397 = vmatpush.bf16.xpose.msra.mxu0 0
    %1398 = vmatpush.bf16.xpose.msra.mxu0 0
    %1399 = vmatpush.bf16.xpose.msra.mxu0 %v1390
    %1400 = vmatmul.bf16.gmra.mxu0 %v1387
    %v1401 = vpop.f32.mrf.mxu0
    %v1402 = vadd.f32 0.0, %v1401
    %v1403 = vpop.f32.mrf.mxu0
    %1404 = vdwg.mxu0
    %v1405 = vsel %vm966, %v1402, -inf
    %1406 = vmax.xlane.f32.xlu0 %v1405
    %v1407 = vpop.xlane.xlu0 %1406
    %v1408 = vsub.f32 %v1402, %v1407
    %v1409 = vmul.f32 %v1408, 1.442695
    %v1410 = vpow.pop %v1409
    %v1411 = vsel %vm966, %v1410, 0.0
    %1412 = vadd.xlane.f32.xlu0 %v1411
    %v1413 = vpop.xlane.xlu0 %1412
    %v1414 = vrcp.pop %v1413
    %v1415 = vpack.c.bf16 %v1410, %v1410
    %1416 = vrot.lane.b32.xlu0 %v1235, 32
    %v1417 = vpop.permute.xlu0 %1416
    %v1419 = vsel %vm966, %v1415, 0
    %v1422 = vsel %vm981, %v1417, 0
    %1424 = vmatpush.bf16.msra.mxu0 0
    %1425 = vmatpush.bf16.msra.mxu0 0
    %1426 = vmatpush.bf16.msra.mxu0 0
    %1427 = vmatpush.bf16.msra.mxu0 0
    %1428 = vmatpush.bf16.msra.mxu0 0
    %1429 = vmatpush.bf16.msra.mxu0 0
    %1430 = vmatpush.bf16.msra.mxu0 0
    %1431 = vmatpush.bf16.msra.mxu0 %v1422
    %1432 = vmatmul.bf16.gmra.mxu0 %v1419
    %v1433 = vpop.f32.mrf.mxu0
    %v1434 = vadd.f32 0.0, %v1433
    %v1435 = vpop.f32.mrf.mxu0
    %1436 = vdwg.mxu0
    %v1437 = vmul.f32 %v1434, %v1414
    %v1438 = vpack.c.bf16 %v1437, %v1437
    %1440 = vrot.lane.b32.xlu0 %v1438, 96
    %v1441 = vpop.permute.xlu0 %1440
    %1443 = vst.msk [vmem:[#allocation2 + $0x4] sm:$0xf] %vm1198, %v1441
    %v1445 = vsel %vm946, %v941, 0
    %v1448 = vsel %vm946, %v943, 0
    %1450 = vmatpush.bf16.xpose.msra.mxu0 0
    %1451 = vmatpush.bf16.xpose.msra.mxu0 0
    %1452 = vmatpush.bf16.xpose.msra.mxu0 0
    %1453 = vmatpush.bf16.xpose.msra.mxu0 0
    %1454 = vmatpush.bf16.xpose.msra.mxu0 0
    %1455 = vmatpush.bf16.xpose.msra.mxu0 0
    %1456 = vmatpush.bf16.xpose.msra.mxu0 0
    %1457 = vmatpush.bf16.xpose.msra.mxu0 %v1448
    %1458 = vmatmul.bf16.gmra.mxu0 %v1445
    %v1459 = vpop.f32.mrf.mxu0
    %v1460 = vadd.f32 0.0, %v1459
    %v1461 = vpop.f32.mrf.mxu0
    %1462 = vdwg.mxu0
    %v1463 = vsel %vm966, %v1460, -inf
    %1464 = vmax.xlane.f32.xlu0 %v1463
    %v1465 = vpop.xlane.xlu0 %1464
    %v1466 = vsub.f32 %v1460, %v1465
    %v1467 = vmul.f32 %v1466, 1.442695
    %v1468 = vpow.pop %v1467
    %v1469 = vsel %vm966, %v1468, 0.0
    %1470 = vadd.xlane.f32.xlu0 %v1469
    %v1471 = vpop.xlane.xlu0 %1470
    %v1472 = vrcp.pop %v1471
    %v1473 = vpack.c.bf16 %v1468, %v1468
    %v1475 = vsel %vm966, %v1473, 0
    %v1478 = vsel %vm981, %v945, 0
    %1480 = vmatpush.bf16.msra.mxu0 0
    %1481 = vmatpush.bf16.msra.mxu0 0
    %1482 = vmatpush.bf16.msra.mxu0 0
    %1483 = vmatpush.bf16.msra.mxu0 0
    %1484 = vmatpush.bf16.msra.mxu0 0
    %1485 = vmatpush.bf16.msra.mxu0 0
    %1486 = vmatpush.bf16.msra.mxu0 0
    %1487 = vmatpush.bf16.msra.mxu0 %v1478
    %1488 = vmatmul.bf16.gmra.mxu0 %v1475
    %v1489 = vpop.f32.mrf.mxu0
    %v1490 = vadd.f32 0.0, %v1489
    %v1491 = vpop.f32.mrf.mxu0
    %1492 = vdwg.mxu0
    %v1493 = vmul.f32 %v1490, %v1472
    %v1494 = vpack.c.bf16 %v1493, %v1493
    %1495 = vst.msk [vmem:[#allocation2 + $0x8] sm:$0xf] %vm1000, %v1494
    %v1497 = vunpack.c.l.b16 %v941
    %v1498 = vpack.c.b16 %v1497, %v1497
    %1499 = vrot.lane.b32.xlu0 %v1498, 96
    %v1500 = vpop.permute.xlu0 %1499
    %v1502 = vunpack.c.l.b16 %v943
    %v1503 = vpack.c.b16 %v1502, %v1502
    %1504 = vrot.lane.b32.xlu0 %v1503, 96
    %v1505 = vpop.permute.xlu0 %1504
    %v1507 = vsel %vm946, %v1500, 0
    %v1510 = vsel %vm946, %v1505, 0
    %1512 = vmatpush.bf16.xpose.msra.mxu0 0
    %1513 = vmatpush.bf16.xpose.msra.mxu0 0
    %1514 = vmatpush.bf16.xpose.msra.mxu0 0
    %1515 = vmatpush.bf16.xpose.msra.mxu0 0
    %1516 = vmatpush.bf16.xpose.msra.mxu0 0
    %1517 = vmatpush.bf16.xpose.msra.mxu0 0
    %1518 = vmatpush.bf16.xpose.msra.mxu0 0
    %1519 = vmatpush.bf16.xpose.msra.mxu0 %v1510
    %1520 = vmatmul.bf16.gmra.mxu0 %v1507
    %v1521 = vpop.f32.mrf.mxu0
    %v1522 = vadd.f32 0.0, %v1521
    %v1523 = vpop.f32.mrf.mxu0
    %1524 = vdwg.mxu0
    %v1525 = vsel %vm966, %v1522, -inf
    %1526 = vmax.xlane.f32.xlu0 %v1525
    %v1527 = vpop.xlane.xlu0 %1526
    %v1528 = vsub.f32 %v1522, %v1527
    %v1529 = vmul.f32 %v1528, 1.442695
    %v1530 = vpow.pop %v1529
    %v1531 = vsel %vm966, %v1530, 0.0
    %1532 = vadd.xlane.f32.xlu0 %v1531
    %v1533 = vpop.xlane.xlu0 %1532
    %v1534 = vrcp.pop %v1533
    %v1535 = vpack.c.bf16 %v1530, %v1530
    %v1537 = vunpack.c.l.b16 %v945
    %v1538 = vpack.c.b16 %v1537, %v1537
    %1539 = vrot.lane.b32.xlu0 %v1538, 96
    %v1540 = vpop.permute.xlu0 %1539
    %v1542 = vsel %vm966, %v1535, 0
    %v1545 = vsel %vm981, %v1540, 0
    %1547 = vmatpush.bf16.msra.mxu0 0
    %1548 = vmatpush.bf16.msra.mxu0 0
    %1549 = vmatpush.bf16.msra.mxu0 0
    %1550 = vmatpush.bf16.msra.mxu0 0
    %1551 = vmatpush.bf16.msra.mxu0 0
    %1552 = vmatpush.bf16.msra.mxu0 0
    %1553 = vmatpush.bf16.msra.mxu0 0
    %1554 = vmatpush.bf16.msra.mxu0 %v1545
    %1555 = vmatmul.bf16.gmra.mxu0 %v1542
    %v1556 = vpop.f32.mrf.mxu0
    %v1557 = vadd.f32 0.0, %v1556
    %v1558 = vpop.f32.mrf.mxu0
    %1559 = vdwg.mxu0
    %v1560 = vmul.f32 %v1557, %v1534
    %v1561 = vpack.c.bf16 %v1560, %v1560
    %1563 = vrot.lane.b32.xlu0 %v1561, 32
    %v1564 = vpop.permute.xlu0 %1563
    %1566 = vst.msk [vmem:[#allocation2 + $0x8] sm:$0xf] %vm1072, %v1564
    %1567 = vrot.lane.b32.xlu0 %v1498, 64
    %v1568 = vpop.permute.xlu0 %1567
    %1569 = vrot.lane.b32.xlu0 %v1503, 64
    %v1570 = vpop.permute.xlu0 %1569
    %v1572 = vsel %vm946, %v1568, 0
    %v1575 = vsel %vm946, %v1570, 0
    %1577 = vmatpush.bf16.xpose.msra.mxu0 0
    %1578 = vmatpush.bf16.xpose.msra.mxu0 0
    %1579 = vmatpush.bf16.xpose.msra.mxu0 0
    %1580 = vmatpush.bf16.xpose.msra.mxu0 0
    %1581 = vmatpush.bf16.xpose.msra.mxu0 0
    %1582 = vmatpush.bf16.xpose.msra.mxu0 0
    %1583 = vmatpush.bf16.xpose.msra.mxu0 0
    %1584 = vmatpush.bf16.xpose.msra.mxu0 %v1575
    %1585 = vmatmul.bf16.gmra.mxu0 %v1572
    %v1586 = vpop.f32.mrf.mxu0
    %v1587 = vadd.f32 0.0, %v1586
    %v1588 = vpop.f32.mrf.mxu0
    %1589 = vdwg.mxu0
    %v1590 = vsel %vm966, %v1587, -inf
    %1591 = vmax.xlane.f32.xlu0 %v1590
    %v1592 = vpop.xlane.xlu0 %1591
    %v1593 = vsub.f32 %v1587, %v1592
    %v1594 = vmul.f32 %v1593, 1.442695
    %v1595 = vpow.pop %v1594
    %v1596 = vsel %vm966, %v1595, 0.0
    %1597 = vadd.xlane.f32.xlu0 %v1596
    %v1598 = vpop.xlane.xlu0 %1597
    %v1599 = vrcp.pop %v1598
    %v1600 = vpack.c.bf16 %v1595, %v1595
    %1601 = vrot.lane.b32.xlu0 %v1538, 64
    %v1602 = vpop.permute.xlu0 %1601
    %v1604 = vsel %vm966, %v1600, 0
    %v1607 = vsel %vm981, %v1602, 0
    %1609 = vmatpush.bf16.msra.mxu0 0
    %1610 = vmatpush.bf16.msra.mxu0 0
    %1611 = vmatpush.bf16.msra.mxu0 0
    %1612 = vmatpush.bf16.msra.mxu0 0
    %1613 = vmatpush.bf16.msra.mxu0 0
    %1614 = vmatpush.bf16.msra.mxu0 0
    %1615 = vmatpush.bf16.msra.mxu0 0
    %1616 = vmatpush.bf16.msra.mxu0 %v1607
    %1617 = vmatmul.bf16.gmra.mxu0 %v1604
    %v1618 = vpop.f32.mrf.mxu0
    %v1619 = vadd.f32 0.0, %v1618
    %v1620 = vpop.f32.mrf.mxu0
    %1621 = vdwg.mxu0
    %v1622 = vmul.f32 %v1619, %v1599
    %v1623 = vpack.c.bf16 %v1622, %v1622
    %1625 = vrot.lane.b32.xlu0 %v1623, 64
    %v1626 = vpop.permute.xlu0 %1625
    %1628 = vst.msk [vmem:[#allocation2 + $0x8] sm:$0xf] %vm1135, %v1626
    %1629 = vrot.lane.b32.xlu0 %v1498, 32
    %v1630 = vpop.permute.xlu0 %1629
    %1631 = vrot.lane.b32.xlu0 %v1503, 32
    %v1632 = vpop.permute.xlu0 %1631
    %v1634 = vsel %vm946, %v1630, 0
    %v1637 = vsel %vm946, %v1632, 0
    %1639 = vmatpush.bf16.xpose.msra.mxu0 0
    %1640 = vmatpush.bf16.xpose.msra.mxu0 0
    %1641 = vmatpush.bf16.xpose.msra.mxu0 0
    %1642 = vmatpush.bf16.xpose.msra.mxu0 0
    %1643 = vmatpush.bf16.xpose.msra.mxu0 0
    %1644 = vmatpush.bf16.xpose.msra.mxu0 0
    %1645 = vmatpush.bf16.xpose.msra.mxu0 0
    %1646 = vmatpush.bf16.xpose.msra.mxu0 %v1637
    %1647 = vmatmul.bf16.gmra.mxu0 %v1634
    %v1648 = vpop.f32.mrf.mxu0
    %v1649 = vadd.f32 0.0, %v1648
    %v1650 = vpop.f32.mrf.mxu0
    %1651 = vdwg.mxu0
    %v1652 = vsel %vm966, %v1649, -inf
    %1653 = vmax.xlane.f32.xlu0 %v1652
    %v1654 = vpop.xlane.xlu0 %1653
    %v1655 = vsub.f32 %v1649, %v1654
    %v1656 = vmul.f32 %v1655, 1.442695
    %v1657 = vpow.pop %v1656
    %v1658 = vsel %vm966, %v1657, 0.0
    %1659 = vadd.xlane.f32.xlu0 %v1658
    %v1660 = vpop.xlane.xlu0 %1659
    %v1661 = vrcp.pop %v1660
    %v1662 = vpack.c.bf16 %v1657, %v1657
    %1663 = vrot.lane.b32.xlu0 %v1538, 32
    %v1664 = vpop.permute.xlu0 %1663
    %v1666 = vsel %vm966, %v1662, 0
    %v1669 = vsel %vm981, %v1664, 0
    %1671 = vmatpush.bf16.msra.mxu0 0
    %1672 = vmatpush.bf16.msra.mxu0 0
    %1673 = vmatpush.bf16.msra.mxu0 0
    %1674 = vmatpush.bf16.msra.mxu0 0
    %1675 = vmatpush.bf16.msra.mxu0 0
    %1676 = vmatpush.bf16.msra.mxu0 0
    %1677 = vmatpush.bf16.msra.mxu0 0
    %1678 = vmatpush.bf16.msra.mxu0 %v1669
    %1679 = vmatmul.bf16.gmra.mxu0 %v1666
    %v1680 = vpop.f32.mrf.mxu0
    %v1681 = vadd.f32 0.0, %v1680
    %v1682 = vpop.f32.mrf.mxu0
    %1683 = vdwg.mxu0
    %v1684 = vmul.f32 %v1681, %v1661
    %v1685 = vpack.c.bf16 %v1684, %v1684
    %1687 = vrot.lane.b32.xlu0 %v1685, 96
    %v1688 = vpop.permute.xlu0 %1687
    %1690 = vst.msk [vmem:[#allocation2 + $0x8] sm:$0xf] %vm1198, %v1688
    %v1691 = vunpack.c.h.b16 %v941
    %v1692 = vpack.c.b16 %v1691, %v1691
    %v1693 = vunpack.c.h.b16 %v943
    %v1694 = vpack.c.b16 %v1693, %v1693
    %v1696 = vsel %vm946, %v1692, 0
    %v1699 = vsel %vm946, %v1694, 0
    %1701 = vmatpush.bf16.xpose.msra.mxu0 0
    %1702 = vmatpush.bf16.xpose.msra.mxu0 0
    %1703 = vmatpush.bf16.xpose.msra.mxu0 0
    %1704 = vmatpush.bf16.xpose.msra.mxu0 0
    %1705 = vmatpush.bf16.xpose.msra.mxu0 0
    %1706 = vmatpush.bf16.xpose.msra.mxu0 0
    %1707 = vmatpush.bf16.xpose.msra.mxu0 0
    %1708 = vmatpush.bf16.xpose.msra.mxu0 %v1699
    %1709 = vmatmul.bf16.gmra.mxu0 %v1696
    %v1710 = vpop.f32.mrf.mxu0
    %v1711 = vadd.f32 0.0, %v1710
    %v1712 = vpop.f32.mrf.mxu0
    %1713 = vdwg.mxu0
    %v1714 = vsel %vm966, %v1711, -inf
    %1715 = vmax.xlane.f32.xlu0 %v1714
    %v1716 = vpop.xlane.xlu0 %1715
    %v1717 = vsub.f32 %v1711, %v1716
    %v1718 = vmul.f32 %v1717, 1.442695
    %v1719 = vpow.pop %v1718
    %v1720 = vsel %vm966, %v1719, 0.0
    %1721 = vadd.xlane.f32.xlu0 %v1720
    %v1722 = vpop.xlane.xlu0 %1721
    %v1723 = vrcp.pop %v1722
    %v1724 = vpack.c.bf16 %v1719, %v1719
    %v1725 = vunpack.c.h.b16 %v945
    %v1726 = vpack.c.b16 %v1725, %v1725
    %v1728 = vsel %vm966, %v1724, 0
    %v1731 = vsel %vm981, %v1726, 0
    %1733 = vmatpush.bf16.msra.mxu0 0
    %1734 = vmatpush.bf16.msra.mxu0 0
    %1735 = vmatpush.bf16.msra.mxu0 0
    %1736 = vmatpush.bf16.msra.mxu0 0
    %1737 = vmatpush.bf16.msra.mxu0 0
    %1738 = vmatpush.bf16.msra.mxu0 0
    %1739 = vmatpush.bf16.msra.mxu0 0
    %1740 = vmatpush.bf16.msra.mxu0 %v1731
    %1741 = vmatmul.bf16.gmra.mxu0 %v1728
    %v1742 = vpop.f32.mrf.mxu0
    %v1743 = vadd.f32 0.0, %v1742
    %v1744 = vpop.f32.mrf.mxu0
    %1745 = vdwg.mxu0
    %v1746 = vmul.f32 %v1743, %v1723
    %v1747 = vpack.c.bf16 %v1746, %v1746
    %1748 = vst.msk [vmem:[#allocation2 + $0xc] sm:$0xf] %vm1000, %v1747
    %1749 = vrot.lane.b32.xlu0 %v1692, 96
    %v1750 = vpop.permute.xlu0 %1749
    %1751 = vrot.lane.b32.xlu0 %v1694, 96
    %v1752 = vpop.permute.xlu0 %1751
    %v1754 = vsel %vm946, %v1750, 0
    %v1757 = vsel %vm946, %v1752, 0
    %1759 = vmatpush.bf16.xpose.msra.mxu0 0
    %1760 = vmatpush.bf16.xpose.msra.mxu0 0
    %1761 = vmatpush.bf16.xpose.msra.mxu0 0
    %1762 = vmatpush.bf16.xpose.msra.mxu0 0
    %1763 = vmatpush.bf16.xpose.msra.mxu0 0
    %1764 = vmatpush.bf16.xpose.msra.mxu0 0
    %1765 = vmatpush.bf16.xpose.msra.mxu0 0
    %1766 = vmatpush.bf16.xpose.msra.mxu0 %v1757
    %1767 = vmatmul.bf16.gmra.mxu0 %v1754
    %v1768 = vpop.f32.mrf.mxu0
    %v1769 = vadd.f32 0.0, %v1768
    %v1770 = vpop.f32.mrf.mxu0
    %1771 = vdwg.mxu0
    %v1772 = vsel %vm966, %v1769, -inf
    %1773 = vmax.xlane.f32.xlu0 %v1772
    %v1774 = vpop.xlane.xlu0 %1773
    %v1775 = vsub.f32 %v1769, %v1774
    %v1776 = vmul.f32 %v1775, 1.442695
    %v1777 = vpow.pop %v1776
    %v1778 = vsel %vm966, %v1777, 0.0
    %1779 = vadd.xlane.f32.xlu0 %v1778
    %v1780 = vpop.xlane.xlu0 %1779
    %v1781 = vrcp.pop %v1780
    %v1782 = vpack.c.bf16 %v1777, %v1777
    %1783 = vrot.lane.b32.xlu0 %v1726, 96
    %v1784 = vpop.permute.xlu0 %1783
    %v1786 = vsel %vm966, %v1782, 0
    %v1789 = vsel %vm981, %v1784, 0
    %1791 = vmatpush.bf16.msra.mxu0 0
    %1792 = vmatpush.bf16.msra.mxu0 0
    %1793 = vmatpush.bf16.msra.mxu0 0
    %1794 = vmatpush.bf16.msra.mxu0 0
    %1795 = vmatpush.bf16.msra.mxu0 0
    %1796 = vmatpush.bf16.msra.mxu0 0
    %1797 = vmatpush.bf16.msra.mxu0 0
    %1798 = vmatpush.bf16.msra.mxu0 %v1789
    %1799 = vmatmul.bf16.gmra.mxu0 %v1786
    %v1800 = vpop.f32.mrf.mxu0
    %v1801 = vadd.f32 0.0, %v1800
    %v1802 = vpop.f32.mrf.mxu0
    %1803 = vdwg.mxu0
    %v1804 = vmul.f32 %v1801, %v1781
    %v1805 = vpack.c.bf16 %v1804, %v1804
    %1807 = vrot.lane.b32.xlu0 %v1805, 32
    %v1808 = vpop.permute.xlu0 %1807
    %1810 = vst.msk [vmem:[#allocation2 + $0xc] sm:$0xf] %vm1072, %v1808
    %1811 = vrot.lane.b32.xlu0 %v1692, 64
    %v1812 = vpop.permute.xlu0 %1811
    %1813 = vrot.lane.b32.xlu0 %v1694, 64
    %v1814 = vpop.permute.xlu0 %1813
    %v1816 = vsel %vm946, %v1812, 0
    %v1819 = vsel %vm946, %v1814, 0
    %1821 = vmatpush.bf16.xpose.msra.mxu0 0
    %1822 = vmatpush.bf16.xpose.msra.mxu0 0
    %1823 = vmatpush.bf16.xpose.msra.mxu0 0
    %1824 = vmatpush.bf16.xpose.msra.mxu0 0
    %1825 = vmatpush.bf16.xpose.msra.mxu0 0
    %1826 = vmatpush.bf16.xpose.msra.mxu0 0
    %1827 = vmatpush.bf16.xpose.msra.mxu0 0
    %1828 = vmatpush.bf16.xpose.msra.mxu0 %v1819
    %1829 = vmatmul.bf16.gmra.mxu0 %v1816
    %v1830 = vpop.f32.mrf.mxu0
    %v1831 = vadd.f32 0.0, %v1830
    %v1832 = vpop.f32.mrf.mxu0
    %1833 = vdwg.mxu0
    %v1834 = vsel %vm966, %v1831, -inf
    %1835 = vmax.xlane.f32.xlu0 %v1834
    %v1836 = vpop.xlane.xlu0 %1835
    %v1837 = vsub.f32 %v1831, %v1836
    %v1838 = vmul.f32 %v1837, 1.442695
    %v1839 = vpow.pop %v1838
    %v1840 = vsel %vm966, %v1839, 0.0
    %1841 = vadd.xlane.f32.xlu0 %v1840
    %v1842 = vpop.xlane.xlu0 %1841
    %v1843 = vrcp.pop %v1842
    %v1844 = vpack.c.bf16 %v1839, %v1839
    %1845 = vrot.lane.b32.xlu0 %v1726, 64
    %v1846 = vpop.permute.xlu0 %1845
    %v1848 = vsel %vm966, %v1844, 0
    %v1851 = vsel %vm981, %v1846, 0
    %1853 = vmatpush.bf16.msra.mxu0 0
    %1854 = vmatpush.bf16.msra.mxu0 0
    %1855 = vmatpush.bf16.msra.mxu0 0
    %1856 = vmatpush.bf16.msra.mxu0 0
    %1857 = vmatpush.bf16.msra.mxu0 0
    %1858 = vmatpush.bf16.msra.mxu0 0
    %1859 = vmatpush.bf16.msra.mxu0 0
    %1860 = vmatpush.bf16.msra.mxu0 %v1851
    %1861 = vmatmul.bf16.gmra.mxu0 %v1848
    %v1862 = vpop.f32.mrf.mxu0
    %v1863 = vadd.f32 0.0, %v1862
    %v1864 = vpop.f32.mrf.mxu0
    %1865 = vdwg.mxu0
    %v1866 = vmul.f32 %v1863, %v1843
    %v1867 = vpack.c.bf16 %v1866, %v1866
    %1869 = vrot.lane.b32.xlu0 %v1867, 64
    %v1870 = vpop.permute.xlu0 %1869
    %1872 = vst.msk [vmem:[#allocation2 + $0xc] sm:$0xf] %vm1135, %v1870
    %1873 = vrot.lane.b32.xlu0 %v1692, 32
    %v1874 = vpop.permute.xlu0 %1873
    %1875 = vrot.lane.b32.xlu0 %v1694, 32
    %v1876 = vpop.permute.xlu0 %1875
    %v1878 = vsel %vm946, %v1874, 0
    %v1881 = vsel %vm946, %v1876, 0
    %1883 = vmatpush.bf16.xpose.msra.mxu0 0
    %1884 = vmatpush.bf16.xpose.msra.mxu0 0
    %1885 = vmatpush.bf16.xpose.msra.mxu0 0
    %1886 = vmatpush.bf16.xpose.msra.mxu0 0
    %1887 = vmatpush.bf16.xpose.msra.mxu0 0
    %1888 = vmatpush.bf16.xpose.msra.mxu0 0
    %1889 = vmatpush.bf16.xpose.msra.mxu0 0
    %1890 = vmatpush.bf16.xpose.msra.mxu0 %v1881
    %1891 = vmatmul.bf16.gmra.mxu0 %v1878
    %v1892 = vpop.f32.mrf.mxu0
    %v1893 = vadd.f32 0.0, %v1892
    %v1894 = vpop.f32.mrf.mxu0
    %1895 = vdwg.mxu0
    %v1896 = vsel %vm966, %v1893, -inf
    %1897 = vmax.xlane.f32.xlu0 %v1896
    %v1898 = vpop.xlane.xlu0 %1897
    %v1899 = vsub.f32 %v1893, %v1898
    %v1900 = vmul.f32 %v1899, 1.442695
    %v1901 = vpow.pop %v1900
    %v1902 = vsel %vm966, %v1901, 0.0
    %1903 = vadd.xlane.f32.xlu0 %v1902
    %v1904 = vpop.xlane.xlu0 %1903
    %v1905 = vrcp.pop %v1904
    %v1906 = vpack.c.bf16 %v1901, %v1901
    %1907 = vrot.lane.b32.xlu0 %v1726, 32
    %v1908 = vpop.permute.xlu0 %1907
    %v1910 = vsel %vm966, %v1906, 0
    %v1913 = vsel %vm981, %v1908, 0
    %1915 = vmatpush.bf16.msra.mxu0 0
    %1916 = vmatpush.bf16.msra.mxu0 0
    %1917 = vmatpush.bf16.msra.mxu0 0
    %1918 = vmatpush.bf16.msra.mxu0 0
    %1919 = vmatpush.bf16.msra.mxu0 0
    %1920 = vmatpush.bf16.msra.mxu0 0
    %1921 = vmatpush.bf16.msra.mxu0 0
    %1922 = vmatpush.bf16.msra.mxu0 %v1913
    %1923 = vmatmul.bf16.gmra.mxu0 %v1910
    %v1924 = vpop.f32.mrf.mxu0
    %v1925 = vadd.f32 0.0, %v1924
    %v1926 = vpop.f32.mrf.mxu0
    %1927 = vdwg.mxu0
    %v1928 = vmul.f32 %v1925, %v1905
    %v1929 = vpack.c.bf16 %v1928, %v1928
    %1931 = vrot.lane.b32.xlu0 %v1929, 96
    %v1932 = vpop.permute.xlu0 %1931
    %1934 = vst.msk [vmem:[#allocation2 + $0xc] sm:$0xf] %vm1198, %v1932
    %v1935 = vld [vmem:[#allocation2] sm:$0xff]
    %v1936 = vld [vmem:[#allocation2 + $0x8] sm:$0xff]
    %v1937 = vld [vmem:[#allocation12] sm:$0xff]
    %v1938 = vld [vmem:[#allocation12 + $0x8] sm:$0xff]
    %v1939 = vld [vmem:[#allocation12 + $0x10] sm:$0xff]
    %v1940 = vld [vmem:[#allocation12 + $0x18] sm:$0xff]
    %v1941 = vld [vmem:[#allocation12 + $0x20] sm:$0xff]
    %v1942 = vld [vmem:[#allocation12 + $0x28] sm:$0xff]
    %v1943 = vld [vmem:[#allocation12 + $0x30] sm:$0xff]
    %v1944 = vld [vmem:[#allocation12 + $0x38] sm:$0xff]
    %v1945 = vld [vmem:[#allocation12 + $0x40] sm:$0xff]
    %v1946 = vld [vmem:[#allocation12 + $0x48] sm:$0xff]
    %v1947 = vld [vmem:[#allocation12 + $0x50] sm:$0xff]
    %v1948 = vld [vmem:[#allocation12 + $0x58] sm:$0xff]
    %v1949 = vld [vmem:[#allocation12 + $0x60] sm:$0xff]
    %v1950 = vld [vmem:[#allocation12 + $0x68] sm:$0xff]
    %v1951 = vld [vmem:[#allocation12 + $0x70] sm:$0xff]
    %v1952 = vld [vmem:[#allocation12 + $0x78] sm:$0xff]
    %v1953 = vld [vmem:[#allocation12 + $0x80] sm:$0xff]
    %v1954 = vld [vmem:[#allocation12 + $0x88] sm:$0xff]
    %v1955 = vld [vmem:[#allocation12 + $0x90] sm:$0xff]
    %v1956 = vld [vmem:[#allocation12 + $0x98] sm:$0xff]
    %v1957 = vld [vmem:[#allocation12 + $0xa0] sm:$0xff]
    %v1958 = vld [vmem:[#allocation12 + $0xa8] sm:$0xff]
    %v1959 = vld [vmem:[#allocation12 + $0xb0] sm:$0xff]
    %v1960 = vld [vmem:[#allocation12 + $0xb8] sm:$0xff]
    %v1961 = vld [vmem:[#allocation12 + $0xc0] sm:$0xff]
    %v1962 = vld [vmem:[#allocation12 + $0xc8] sm:$0xff]
    %v1963 = vld [vmem:[#allocation12 + $0xd0] sm:$0xff]
    %v1964 = vld [vmem:[#allocation12 + $0xd8] sm:$0xff]
    %v1965 = vld [vmem:[#allocation12 + $0xe0] sm:$0xff]
    %v1966 = vld [vmem:[#allocation12 + $0xe8] sm:$0xff]
    %v1967 = vld [vmem:[#allocation12 + $0xf0] sm:$0xff]
    %v1968 = vld [vmem:[#allocation12 + $0xf8] sm:$0xff]
    %v1969 = vld [vmem:[%s9] sm:$0x3]
    %v1971 = vperm.slane %v1969, 0
    %v1972 = vperm.slane %v1969, 1
    %v1977 = vunpack.c.l.b16 %v1935
    %v1978 = vunpack.c.h.b16 %v1935
    %v1979 = vunpack.c.l.b16 %v1936
    %v1980 = vunpack.c.h.b16 %v1936
    %v1981 = vpack.c.b16 %v1979, %v1977
    %v1982 = vpack.c.b16 %v1980, %v1978
    %v2017 = vunpack.c.l.b16 %v1937
    %v2018 = vunpack.c.h.b16 %v1937
    %v2019 = vunpack.c.l.b16 %v1938
    %v2020 = vunpack.c.h.b16 %v1938
    %v2021 = vunpack.c.l.b16 %v1939
    %v2022 = vunpack.c.h.b16 %v1939
    %v2023 = vunpack.c.l.b16 %v1940
    %v2024 = vunpack.c.h.b16 %v1940
    %v2025 = vunpack.c.l.b16 %v1941
    %v2026 = vunpack.c.h.b16 %v1941
    %v2027 = vunpack.c.l.b16 %v1942
    %v2028 = vunpack.c.h.b16 %v1942
    %v2029 = vunpack.c.l.b16 %v1943
    %v2030 = vunpack.c.h.b16 %v1943
    %v2031 = vunpack.c.l.b16 %v1944
    %v2032 = vunpack.c.h.b16 %v1944
    %v2033 = vunpack.c.l.b16 %v1945
    %v2034 = vunpack.c.h.b16 %v1945
    %v2035 = vunpack.c.l.b16 %v1946
    %v2036 = vunpack.c.h.b16 %v1946
    %v2037 = vunpack.c.l.b16 %v1947
    %v2038 = vunpack.c.h.b16 %v1947
    %v2039 = vunpack.c.l.b16 %v1948
    %v2040 = vunpack.c.h.b16 %v1948
    %v2041 = vunpack.c.l.b16 %v1949
    %v2042 = vunpack.c.h.b16 %v1949
    %v2043 = vunpack.c.l.b16 %v1950
    %v2044 = vunpack.c.h.b16 %v1950
    %v2045 = vunpack.c.l.b16 %v1951
    %v2046 = vunpack.c.h.b16 %v1951
    %v2047 = vunpack.c.l.b16 %v1952
    %v2048 = vunpack.c.h.b16 %v1952
    %v2049 = vunpack.c.l.b16 %v1953
    %v2050 = vunpack.c.h.b16 %v1953
    %v2051 = vunpack.c.l.b16 %v1954
    %v2052 = vunpack.c.h.b16 %v1954
    %v2053 = vunpack.c.l.b16 %v1955
    %v2054 = vunpack.c.h.b16 %v1955
    %v2055 = vunpack.c.l.b16 %v1956
    %v2056 = vunpack.c.h.b16 %v1956
    %v2057 = vunpack.c.l.b16 %v1957
    %v2058 = vunpack.c.h.b16 %v1957
    %v2059 = vunpack.c.l.b16 %v1958
    %v2060 = vunpack.c.h.b16 %v1958
    %v2061 = vunpack.c.l.b16 %v1959
    %v2062 = vunpack.c.h.b16 %v1959
    %v2063 = vunpack.c.l.b16 %v1960
    %v2064 = vunpack.c.h.b16 %v1960
    %v2065 = vunpack.c.l.b16 %v1961
    %v2066 = vunpack.c.h.b16 %v1961
    %v2067 = vunpack.c.l.b16 %v1962
    %v2068 = vunpack.c.h.b16 %v1962
    %v2069 = vunpack.c.l.b16 %v1963
    %v2070 = vunpack.c.h.b16 %v1963
    %v2071 = vunpack.c.l.b16 %v1964
    %v2072 = vunpack.c.h.b16 %v1964
    %v2073 = vunpack.c.l.b16 %v1965
    %v2074 = vunpack.c.h.b16 %v1965
    %v2075 = vunpack.c.l.b16 %v1966
    %v2076 = vunpack.c.h.b16 %v1966
    %v2077 = vunpack.c.l.b16 %v1967
    %v2078 = vunpack.c.h.b16 %v1967
    %v2079 = vunpack.c.l.b16 %v1968
    %v2080 = vunpack.c.h.b16 %v1968
    %v2081 = vpack.c.b16 %v2019, %v2017
    %v2082 = vpack.c.b16 %v2020, %v2018
    %v2083 = vpack.c.b16 %v2023, %v2021
    %v2084 = vpack.c.b16 %v2024, %v2022
    %v2085 = vpack.c.b16 %v2027, %v2025
    %v2086 = vpack.c.b16 %v2028, %v2026
    %v2087 = vpack.c.b16 %v2031, %v2029
    %v2088 = vpack.c.b16 %v2032, %v2030
    %v2089 = vpack.c.b16 %v2035, %v2033
    %v2090 = vpack.c.b16 %v2036, %v2034
    %v2091 = vpack.c.b16 %v2039, %v2037
    %v2092 = vpack.c.b16 %v2040, %v2038
    %v2093 = vpack.c.b16 %v2043, %v2041
    %v2094 = vpack.c.b16 %v2044, %v2042
    %v2095 = vpack.c.b16 %v2047, %v2045
    %v2096 = vpack.c.b16 %v2048, %v2046
    %v2097 = vpack.c.b16 %v2051, %v2049
    %v2098 = vpack.c.b16 %v2052, %v2050
    %v2099 = vpack.c.b16 %v2055, %v2053
    %v2100 = vpack.c.b16 %v2056, %v2054
    %v2101 = vpack.c.b16 %v2059, %v2057
    %v2102 = vpack.c.b16 %v2060, %v2058
    %v2103 = vpack.c.b16 %v2063, %v2061
    %v2104 = vpack.c.b16 %v2064, %v2062
    %v2105 = vpack.c.b16 %v2067, %v2065
    %v2106 = vpack.c.b16 %v2068, %v2066
    %v2107 = vpack.c.b16 %v2071, %v2069
    %v2108 = vpack.c.b16 %v2072, %v2070
    %v2109 = vpack.c.b16 %v2075, %v2073
    %v2110 = vpack.c.b16 %v2076, %v2074
    %v2111 = vpack.c.b16 %v2079, %v2077
    %v2112 = vpack.c.b16 %v2080, %v2078
    %2145 = vmatpush.bf16.msra.mxu0 %v2095
    %2146 = vmatpush.bf16.msra.mxu0 %v2093
    %2147 = vmatpush.bf16.msra.mxu0 %v2091
    %2148 = vmatpush.bf16.msra.mxu0 %v2089
    %2149 = vmatpush.bf16.msra.mxu0 %v2087
    %2150 = vmatpush.bf16.msra.mxu0 %v2085
    %2151 = vmatpush.bf16.msra.mxu0 %v2083
    %2152 = vmatpush.bf16.msra.mxu0 %v2081
    %2153 = vmatmul.bf16.gmra.mxu0 %v1981
    %v2154 = vpop.f32.mrf.mxu0
    %v2155 = vadd.f32 %v1971, %v2154
    %v2156 = vpop.f32.mrf.mxu0
    %v2157 = vadd.f32 %v1971, %v2156
    %2158 = vdwg.mxu0
    %2159 = vmatpush.bf16.msra.mxu0 %v2111
    %2160 = vmatpush.bf16.msra.mxu0 %v2109
    %2161 = vmatpush.bf16.msra.mxu0 %v2107
    %2162 = vmatpush.bf16.msra.mxu0 %v2105
    %2163 = vmatpush.bf16.msra.mxu0 %v2103
    %2164 = vmatpush.bf16.msra.mxu0 %v2101
    %2165 = vmatpush.bf16.msra.mxu0 %v2099
    %2166 = vmatpush.bf16.msra.mxu0 %v2097
    %2167 = vmatmul.bf16.gmra.mxu0 %v1982
    %v2168 = vpop.f32.mrf.mxu0
    %v2169 = vadd.f32 %v2155, %v2168
    %v2170 = vpop.f32.mrf.mxu0
    %v2171 = vadd.f32 %v2157, %v2170
    %2172 = vdwg.mxu0
    %2173 = vmatpush.bf16.msra.mxu0 %v2096
    %2174 = vmatpush.bf16.msra.mxu0 %v2094
    %2175 = vmatpush.bf16.msra.mxu0 %v2092
    %2176 = vmatpush.bf16.msra.mxu0 %v2090
    %2177 = vmatpush.bf16.msra.mxu0 %v2088
    %2178 = vmatpush.bf16.msra.mxu0 %v2086
    %2179 = vmatpush.bf16.msra.mxu0 %v2084
    %2180 = vmatpush.bf16.msra.mxu0 %v2082
    %2181 = vmatmul.bf16.gmra.mxu0 %v1981
    %v2182 = vpop.f32.mrf.mxu0
    %v2183 = vadd.f32 %v1972, %v2182
    %v2184 = vpop.f32.mrf.mxu0
    %v2185 = vadd.f32 %v1972, %v2184
    %2186 = vdwg.mxu0
    %2187 = vmatpush.bf16.msra.mxu0 %v2112
    %2188 = vmatpush.bf16.msra.mxu0 %v2110
    %2189 = vmatpush.bf16.msra.mxu0 %v2108
    %2190 = vmatpush.bf16.msra.mxu0 %v2106
    %2191 = vmatpush.bf16.msra.mxu0 %v2104
    %2192 = vmatpush.bf16.msra.mxu0 %v2102
    %2193 = vmatpush.bf16.msra.mxu0 %v2100
    %2194 = vmatpush.bf16.msra.mxu0 %v2098
    %2195 = vmatmul.bf16.gmra.mxu0 %v1982
    %v2196 = vpop.f32.mrf.mxu0
    %v2197 = vadd.f32 %v2183, %v2196
    %v2198 = vpop.f32.mrf.mxu0
    %v2199 = vadd.f32 %v2185, %v2198
    %2200 = vdwg.mxu0
    %v2201 = vunpack.c.l.bf16 %v150
    %v2202 = vunpack.c.h.bf16 %v150
    %v2203 = vunpack.c.l.bf16 %v151
    %v2204 = vunpack.c.h.bf16 %v151
    %v2205 = vadd.f32 %v2201, %v2169
    %v2206 = vadd.f32 %v2202, %v2197
    %v2207 = vadd.f32 %v2203, %v2171
    %v2208 = vadd.f32 %v2204, %v2199
    %v2209 = vadd.f32 %v2205, %v2206
    %2210 = vadd.xlane.f32.xlu0 %v2209
    %v2211 = vpop.xlane.xlu0 %2210
    %v2212 = vadd.f32 %v2207, %v2208
    %2213 = vadd.xlane.f32.xlu0 %v2212
    %v2214 = vpop.xlane.xlu0 %2213
    %v2215 = vrcp.pop 256.0
    %v2216 = vmul.f32 256.0, %v2215
    %v2217 = vsub.f32 1.0, %v2216
    %v2218 = vmul.f32 %v2215, %v2217
    %v2219 = vadd.f32 %v2215, %v2218
    %vm2220 = vweird.f32 %v2215
    %v2221 = vsel %vm2220, %v2215, %v2219
    %v2222 = vmul.f32 %v2211, %v2221
    %v2223 = vmul.f32 %v2214, %v2221
    %v2224 = vsub.f32 %v2205, %v2222
    %v2225 = vsub.f32 %v2206, %v2222
    %v2226 = vsub.f32 %v2207, %v2223
    %v2227 = vsub.f32 %v2208, %v2223
    %v2228 = vmul.f32 %v2224, %v2224
    %v2229 = vmul.f32 %v2225, %v2225
    %v2230 = vmul.f32 %v2226, %v2226
    %v2231 = vmul.f32 %v2227, %v2227
    %v2232 = vadd.f32 %v2228, %v2229
    %2233 = vadd.xlane.f32.xlu0 %v2232
    %v2234 = vpop.xlane.xlu0 %2233
    %v2235 = vadd.f32 %v2230, %v2231
    %2236 = vadd.xlane.f32.xlu0 %v2235
    %v2237 = vpop.xlane.xlu0 %2236
    %v2238 = vmul.f32 %v2234, %v2221
    %v2239 = vmul.f32 %v2237, %v2221
    %v2240 = vadd.f32 %v2238, 1e-05
    %v2241 = vadd.f32 %v2239, 1e-05
    %v2242 = vrsqrt.pop %v2240
    %v2243 = vmul.f32 %v2242, %v2240
    %v2244 = vmul.f32 %v2243, %v2242
    %v2245 = vmul.f32 0.5, %v2244
    %v2246 = vsub.f32 1.5, %v2245
    %v2247 = vmul.f32 %v2242, %v2246
    %vm2248 = vweird.f32 %v2240
    %vm2249 = vweird.f32 %v2242
    %vm2250 = vmor %vm2248, %vm2249
    %v2251 = vsel %vm2250, %v2242, %v2247
    %v2252 = vrsqrt.pop %v2241
    %v2253 = vmul.f32 %v2252, %v2241
    %v2254 = vmul.f32 %v2253, %v2252
    %v2255 = vmul.f32 0.5, %v2254
    %v2256 = vsub.f32 1.5, %v2255
    %v2257 = vmul.f32 %v2252, %v2256
    %vm2258 = vweird.f32 %v2241
    %vm2259 = vweird.f32 %v2252
    %vm2260 = vmor %vm2258, %vm2259
    %v2261 = vsel %vm2260, %v2252, %v2257
    %v2262 = vmul.f32 %v2224, %v2251
    %v2263 = vmul.f32 %v2225, %v2251
    %v2264 = vmul.f32 %v2226, %v2261
    %v2265 = vmul.f32 %v2227, %v2261
    %v2266 = vld [vmem:[#allocation14] sm:$0x3]
    %v2268 = vperm.slane %v2266, 0
    %v2269 = vperm.slane %v2266, 1
    %v2272 = vmul.f32 %v2262, %v2268
    %v2273 = vmul.f32 %v2263, %v2269
    %v2274 = vmul.f32 %v2264, %v2268
    %v2275 = vmul.f32 %v2265, %v2269
    %v2276 = vld [vmem:[%s11] sm:$0x3]
    %v2278 = vperm.slane %v2276, 0
    %v2279 = vperm.slane %v2276, 1
    %v2282 = vadd.f32 %v2272, %v2278
    %v2283 = vadd.f32 %v2273, %v2279
    %v2284 = vadd.f32 %v2274, %v2278
    %v2285 = vadd.f32 %v2275, %v2279
    %v2286 = vpack.c.bf16 %v2283, %v2282
    %v2287 = vpack.c.bf16 %v2285, %v2284
    %2288 = vst [vmem:[#allocation15] sm:$0xff] %v2286
    %2289 = vst [vmem:[#allocation15 + $0x8] sm:$0xff] %v2287
    // Predicated region
    $region78: #{tpu_custom_call.1} parent=1 // pred_check
      _
    $region79: #{tpu_custom_call.1} parent=1 // pred_check_branch
      %2291 = sbr.rel (0) target = $region81
    $region80: #{tpu_custom_call.1} parent=1 // pred_region
      %2293 = vsyncadd [#allocation5], 0
      %s2294 = sshll.u32 [#allocation15], 4
      %s2295 = int_to_ptr.vmem [resolvable:$true] %s2294
      %s2296 = sshll.u32 %s12, 4
      %s2297 = int_to_ptr.hbm [resolvable:$true] %s2296
      %2302 = dma.vmem_to_hbm [thread:$0]  %s2295, 256, %s2297, [#allocation5], 128, 128, 8
    $region81: #{tpu_custom_call.1} parent=1 // pred_fallthru
      _
    // Predicated region
    $region82: #{tpu_custom_call.1} parent=1 // pred_check
      _
    $region83: #{tpu_custom_call.1} parent=1 // pred_check_branch
      %2304 = sbr.rel (0) target = $region85
    $region84: #{tpu_custom_call.1} parent=1 // pred_region
      %2306 = dma.done [#allocation5], 256
    $region85: #{tpu_custom_call.1} parent=1 // pred_fallthru
      _
    %2307 = vsyncpa [#allocation4], 1
    %2308 = vsyncpa [#allocation7], 1
    %2309 = vsyncpa [#allocation10], 1
    %2310 = vsyncpa [#allocation13], 1
    %2311 = vsyncpa [#allocation5], 1

</llo_original>
